<compile_context>
chip_gen: v7x
topology: tpu7x:2x2x1
jax: 0.10.0
libtpu: 0.0.40
codegen_flags: <defaults>
</compile_context>

<pallas_src>
import functools

import jax
import jax.numpy as jnp
from jax.experimental import pallas as pl
from jax.experimental.pallas import tpu as pltpu

EPS = 1e-5
F32 = 4  # bytes per float32


def _vmem_budget_bytes():
    # ~3/4 of per-core VMEM: ~48 MiB on v7x, ~96 MiB on v5e/v6e. Conservative fallback.
    cap = 64 << 20
    try:
        cap = int(getattr(pltpu.get_tpu_info(), "vmem_capacity_bytes", cap))
    except Exception:
        pass
    return (3 * cap) // 4


def _pick_batch_block(N, per_image_bytes, budget):
    """Largest divisor of N whose (double-buffered) footprint fits ~half the VMEM
    budget, keeping >= 2 grid steps (v7x megacore) whenever N >= 2."""
    best = 1
    for nb in range(1, N + 1):
        if N % nb:
            continue
        if 2 * nb * per_image_bytes > budget // 2:
            break
        if N >= 2 and (N // nb) < 2:
            break
        best = nb
    return best


# ----------------------------------------------------------------------------
# Pass B: BN1 (folded scale/shift) + ReLU + 1x1 transposed conv as a single
# (Cm, C0) @ (C0, HW) bf16 matmul (f32 accumulation); also emits per-block
# partial BN2 statistics of y (computed from the f32 accumulator while resident).
# ----------------------------------------------------------------------------
def bn1_conv1_kernel(x_ref, s1_ref, t1_ref, w1t_ref, y_ref, ys_ref, *, Nb):
    s1 = s1_ref[...]                                       # (C0, 1) f32
    t1 = t1_ref[...]
    w1t = w1t_ref[...]                                     # (Cm, C0) bf16, resident
    stats = None
    for b in range(Nb):                                    # static, unrolled
        h = jnp.maximum(x_ref[b] * s1 + t1, 0.0)           # (C0, HW) f32 elementwise
        y = jnp.dot(w1t, h.astype(jnp.bfloat16),
                    preferred_element_type=jnp.float32)    # (Cm, HW) bf16 MXU, f32 acc
        y_ref[b] = y.astype(y_ref.dtype)                   # stored bf16
        st = jnp.concatenate(
            [jnp.sum(y, axis=1, keepdims=True),
             jnp.sum(y * y, axis=1, keepdims=True)], axis=1)   # (Cm, 2)
        stats = st if stats is None else stats + st
    ys_ref[0] = stats


# ----------------------------------------------------------------------------
# Pass C: BN2 (folded) + ReLU + 3x3 transposed conv (stride=1, pad=1) as THREE
# accumulating (G, 3*Cm) @ (3*Cm, HW) matmuls (one per kernel row). Each tap is a
# lane roll of the activation times a precomputed static border mask (zero padding
# fused in-register, no padded buffer, no 9-way im2col concat). The concat with x
# is two direct sub-block stores (no (C0+G, HW) temporary).
# ----------------------------------------------------------------------------
def bn2_conv2_concat_kernel(x_ref, y_ref, s2_ref, t2_ref, w2_ref, mask_ref,
                            out_ref, *, Nb, C0, Cm, G, W, HW):
    s2 = s2_ref[...]                                       # (Cm, 1) f32
    t2 = t2_ref[...]
    w2_rows = [w2_ref[i] for i in range(3)]                # 3 x (G, 3*Cm) bf16
    mask_rows = [mask_ref[k:k + 1, :] for k in range(9)]   # 9 x (1, HW) f32 (hoisted)

    for b in range(Nb):                                    # static, unrolled
        a = jnp.maximum(y_ref[b].astype(jnp.float32) * s2 + t2, 0.0)   # (Cm, HW) f32
        out2 = jnp.zeros((G, HW), jnp.float32)
        for i in range(3):                                 # kernel-row groups of 3 taps
            taps = []
            for j in range(3):
                di, dj = i - 1, j - 1
                shift = (-(di * W + dj)) % HW
                p = pltpu.roll(a, shift, 1) if shift else a            # XLU lane roll
                if di == 0 and dj == 0:
                    m = p                                              # center: all valid
                else:
                    m = p * mask_rows[i * 3 + j]                       # fused zero-pad
                taps.append(m.astype(jnp.bfloat16))
            col = jnp.concatenate(taps, axis=0)                        # (3*Cm, HW) bf16
            out2 = out2 + jnp.dot(w2_rows[i], col,
                                  preferred_element_type=jnp.float32)  # (G, HW) MXU
        out_ref[b, :C0, :] = x_ref[b]                                  # x passthrough
        out_ref[b, C0:, :] = out2.astype(out_ref.dtype)


# ----------------------------------------------------------------------------
# Wrapper: free NCHW<->(N, C, H*W) reshapes, BN folding, weight / mask prep.
# ----------------------------------------------------------------------------
@jax.jit
def gen_bottleneck(x_nchw, g1, b1, W1, g2, b2, W2):
    N, C0, H, W = x_nchw.shape
    Cm = W1.shape[1]          # interChannels = 4 * growthRate
    G = W2.shape[1]           # growthRate
    HW = H * W
    M = N * HW

    x3 = x_nchw.reshape(N, C0, HW)        # NCHW -> (N, C, H*W): free reshape

    # --- BN1 batch statistics: tiny memory-bound reduce, leave it to XLA ------
    mean1 = jnp.mean(x3, axis=(0, 2))
    var1 = jnp.maximum(jnp.mean(x3 * x3, axis=(0, 2)) - mean1 * mean1, 0.0)
    inv1 = jax.lax.rsqrt(var1 + EPS)
    s1 = (g1 * inv1).reshape(C0, 1)
    t1 = (b1 - mean1 * g1 * inv1).reshape(C0, 1)

    W1t = W1[:, :, 0, 0].T.astype(jnp.bfloat16)   # (Cm, C0): 1x1 convT == channel matmul

    # --- block sizing / VMEM budget -------------------------------------------
    budget = int(_vmem_budget_bytes())
    per_img = (F32 * C0 * HW + 2 * Cm * HW + F32 * (C0 + G) * HW        # blocks
               + F32 * Cm * HW + 2 * 6 * Cm * HW + F32 * G * HW)        # temporaries
    Nb = _pick_batch_block(N, per_img, budget)
    nblk = N // Nb

    cp = pltpu.CompilerParams(dimension_semantics=("parallel",),
                              vmem_limit_bytes=budget)

    # --- pass B: BN1 + ReLU + 1x1 convT, plus BN2 partial stats ---------------
    y, ys = pl.pallas_call(
        functools.partial(bn1_conv1_kernel, Nb=Nb),
        out_shape=(jax.ShapeDtypeStruct((N, Cm, HW), jnp.bfloat16),
                   jax.ShapeDtypeStruct((nblk, Cm, 2), jnp.float32)),
        grid=(nblk,),
        in_specs=[pl.BlockSpec((Nb, C0, HW), lambda n: (n, 0, 0)),
                  pl.BlockSpec((C0, 1), lambda n: (0, 0)),
                  pl.BlockSpec((C0, 1), lambda n: (0, 0)),
                  pl.BlockSpec((Cm, C0), lambda n: (0, 0))],
        out_specs=(pl.BlockSpec((Nb, Cm, HW), lambda n: (n, 0, 0)),
                   pl.BlockSpec((1, Cm, 2), lambda n: (n, 0, 0))),
        compiler_params=cp,
        cost_estimate=pl.CostEstimate(
            flops=2 * Cm * C0 * HW * N + 4 * C0 * HW * N,
            transcendentals=0,
            bytes_accessed=F32 * C0 * HW * N + 2 * Cm * HW * N + 2 * Cm * C0),
    )(x3, s1, t1, W1t)

    ys = jnp.sum(ys, axis=0)              # (Cm, 2) tiny reduce over blocks
    mean2 = ys[:, 0] / M
    var2 = jnp.maximum(ys[:, 1] / M - mean2 * mean2, 0.0)
    inv2 = jax.lax.rsqrt(var2 + EPS)
    s2 = (g2 * inv2).reshape(Cm, 1)
    t2 = (b2 - mean2 * g2 * inv2).reshape(Cm, 1)

    # ConvTranspose2d 3x3 (stride=1, pad=1) == regular conv with flipped kernel and
    # pad 1; lay the flipped kernel out as (3, G, 3*Cm): kernel-row major, then
    # (tap-within-row, channel) minor -> matches the per-row col built in pass C.
    W2f = jnp.transpose(W2[:, :, ::-1, ::-1], (2, 3, 0, 1)).reshape(9 * Cm, G)
    W2g = W2f.T.reshape(G, 3, 3 * Cm).transpose(1, 0, 2).astype(jnp.bfloat16)

    # 9 static border masks (zero padding), hoisted out of the kernel body.
    lane = jnp.arange(HW, dtype=jnp.int32)
    hh, ww = lane // W, lane % W
    masks = jnp.stack(
        [((hh + di >= 0) & (hh + di < H) & (ww + dj >= 0) & (ww + dj < W))
         for di in (-1, 0, 1) for dj in (-1, 0, 1)],
        axis=0).astype(jnp.float32)                          # (9, HW)

    # --- pass C: BN2 + ReLU + 3x3 convT + channel concat ----------------------
    out3 = pl.pallas_call(
        functools.partial(bn2_conv2_concat_kernel,
                          Nb=Nb, C0=C0, Cm=Cm, G=G, W=W, HW=HW),
        out_shape=jax.ShapeDtypeStruct((N, C0 + G, HW), jnp.float32),
        grid=(nblk,),
        in_specs=[pl.BlockSpec((Nb, C0, HW), lambda n: (n, 0, 0)),
                  pl.BlockSpec((Nb, Cm, HW), lambda n: (n, 0, 0)),
                  pl.BlockSpec((Cm, 1), lambda n: (0, 0)),
                  pl.BlockSpec((Cm, 1), lambda n: (0, 0)),
                  pl.BlockSpec((3, G, 3 * Cm), lambda n: (0, 0, 0)),
                  pl.BlockSpec((9, HW), lambda n: (0, 0))],
        out_specs=pl.BlockSpec((Nb, C0 + G, HW), lambda n: (n, 0, 0)),
        compiler_params=cp,
        cost_estimate=pl.CostEstimate(
            flops=2 * G * 9 * Cm * HW * N + 6 * Cm * HW * N,
            transcendentals=0,
            bytes_accessed=(F32 * C0 * HW + 2 * Cm * HW
                            + F32 * (C0 + G) * HW) * N),
    )(x3, y, s2, t2, W2g, masks)

    return out3.reshape(N, C0 + G, H, W)  # free reshape back to NCHW


# ----------------------------------------------------------------------------
# Pure-JAX f32 reference (mirrors the PyTorch forward in NCHW) for validation.
# ----------------------------------------------------------------------------
def ref_forward(x, g1, b1, W1, g2, b2, W2, eps=EPS):
    def bn(t, g, b):
        m = t.mean(axis=(0, 2, 3), keepdims=True)
        v = ((t - m) ** 2).mean(axis=(0, 2, 3), keepdims=True)
        return (t - m) / jnp.sqrt(v + eps) * g.reshape(1, -1, 1, 1) + b.reshape(1, -1, 1, 1)

    h = jax.nn.relu(bn(x, g1, b1))
    y = jnp.einsum('nchw,co->nohw', h, W1[:, :, 0, 0])          # ConvTranspose2d 1x1
    a = jax.nn.relu(bn(y, g2, b2))

    # ConvTranspose2d 3x3, stride=1, padding=1 (scatter form)
    N, C, H, W = a.shape
    G = W2.shape[1]
    ap = jnp.pad(a, ((0, 0), (0, 0), (2, 2), (2, 2)))
    out = jnp.zeros((N, G, H, W), a.dtype)
    for i in range(3):
        for j in range(3):
            xs = ap[:, :, 3 - i:3 - i + H, 3 - j:3 - j + W]
            out = out + jnp.einsum('nchw,cg->nghw', xs, W2[:, :, i, j])
    return jnp.concatenate([x, out], axis=1)


if __name__ == "__main__":
    key = jax.random.PRNGKey(0)
    nChannels, growthRate = 4, 4
    interChannels = 4 * growthRate
    N, H, W = 2, 16, 16

    ks = jax.random.split(key, 7)
    x = jax.random.normal(ks[0], (N, nChannels, H, W), jnp.float32)
    g1 = 1.0 + 0.1 * jax.random.normal(ks[1], (nChannels,), jnp.float32)
    b1 = 0.1 * jax.random.normal(ks[2], (nChannels,), jnp.float32)
    W1 = 0.2 * jax.random.normal(ks[3], (nChannels, interChannels, 1, 1), jnp.float32)
    g2 = 1.0 + 0.1 * jax.random.normal(ks[4], (interChannels,), jnp.float32)
    b2 = 0.1 * jax.random.normal(ks[5], (interChannels,), jnp.float32)
    W2 = 0.2 * jax.random.normal(ks[6], (interChannels, growthRate, 3, 3), jnp.float32)

    out = gen_bottleneck(x, g1, b1, W1, g2, b2, W2)
    out = jax.block_until_ready(out)

    assert out.shape == (N, nChannels + growthRate, H, W), out.shape
    ref = ref_forward(x, g1, b1, W1, g2, b2, W2)
    # bf16 MXU operands (f32 accumulation) -> tolerance reflects bf16 quantization.
    max_err = float(jnp.max(jnp.abs(out - ref)))
    assert max_err < 1e-1, f"max abs err too large: {max_err}"

    print("KERNEL_OK")
</pallas_src>

<mosaic_0001>
module attributes {stable_mosaic.version = 11 : i64} {
  func.func @bn1_conv1_kernel(%arg0: i32, %arg1: memref<1x4x256xf32, #tpu.memory_space<vmem>>, %arg2: memref<4x1xf32, #tpu.memory_space<vmem>>, %arg3: memref<4x1xf32, #tpu.memory_space<vmem>>, %arg4: memref<16x4xbf16, #tpu.memory_space<vmem>>, %arg5: memref<1x16x256xbf16, #tpu.memory_space<vmem>>, %arg6: memref<1x16x2xf32, #tpu.memory_space<vmem>>) attributes {dimension_semantics = [#tpu.dimension_semantics<parallel>], iteration_bounds = array<i64: 2>, scalar_prefetch = 0 : i64, scratch_operands = 0 : i64, tpu.core_type = #tpu.core_type<tc>, window_params = [{transform_indices = @transform_0, window_bounds = array<i64: 1, 4, 256>}, {pipeline_mode = #tpu.pipeline_mode<synchronous>, transform_indices = @transform_1, window_bounds = array<i64: 4, 1>}, {pipeline_mode = #tpu.pipeline_mode<synchronous>, transform_indices = @transform_2, window_bounds = array<i64: 4, 1>}, {pipeline_mode = #tpu.pipeline_mode<synchronous>, transform_indices = @transform_3, window_bounds = array<i64: 16, 4>}, {transform_indices = @transform_4, window_bounds = array<i64: 1, 16, 256>}, {transform_indices = @transform_5, window_bounds = array<i64: 1, 16, 2>}]} {
    %c0 = arith.constant 0 : index
    %c0_0 = arith.constant 0 : index
    %0 = vector.load %arg2[%c0, %c0_0] : memref<4x1xf32, #tpu.memory_space<vmem>>, vector<4x1xf32>
    %c0_1 = arith.constant 0 : index
    %c0_2 = arith.constant 0 : index
    %1 = vector.load %arg3[%c0_1, %c0_2] : memref<4x1xf32, #tpu.memory_space<vmem>>, vector<4x1xf32>
    %c0_3 = arith.constant 0 : index
    %c0_4 = arith.constant 0 : index
    %2 = vector.load %arg4[%c0_3, %c0_4] : memref<16x4xbf16, #tpu.memory_space<vmem>>, vector<16x4xbf16>
    %c0_5 = arith.constant 0 : index
    %c0_6 = arith.constant 0 : index
    %c0_7 = arith.constant 0 : index
    %3 = vector.load %arg1[%c0_5, %c0_6, %c0_7] : memref<1x4x256xf32, #tpu.memory_space<vmem>>, vector<1x4x256xf32>
    %4 = vector.shape_cast %3 : vector<1x4x256xf32> to vector<4x256xf32>
    %5 = vector.broadcast %0 : vector<4x1xf32> to vector<4x256xf32>
    %6 = arith.mulf %4, %5 : vector<4x256xf32>
    %7 = vector.broadcast %1 : vector<4x1xf32> to vector<4x256xf32>
    %8 = arith.addf %6, %7 : vector<4x256xf32>
    %cst = arith.constant 0.000000e+00 : f32
    %9 = vector.broadcast %cst : f32 to vector<4x256xf32>
    %10 = arith.maximumf %8, %9 : vector<4x256xf32>
    %11 = arith.truncf %10 : vector<4x256xf32> to vector<4x256xbf16>
    %cst_8 = arith.constant dense<0.000000e+00> : vector<16x256xf32>
    %12 = tpu.matmul %2, %11, %cst_8 {dimension_numbers = #tpu.dot_dimension_numbers<[1], [0], [0], [1], [0, 0, 1, 1], [], []>} : vector<16x4xbf16>, vector<4x256xbf16>, vector<16x256xf32> -> vector<16x256xf32>
    %13 = arith.truncf %12 : vector<16x256xf32> to vector<16x256xbf16>
    %c0_9 = arith.constant 0 : index
    %c0_10 = arith.constant 0 : index
    %c0_11 = arith.constant 0 : index
    %14 = vector.load %arg5[%c0_9, %c0_10, %c0_11] : memref<1x16x256xbf16, #tpu.memory_space<vmem>>, vector<1x16x256xbf16>
    %15 = vector.shape_cast %14 : vector<1x16x256xbf16> to vector<16x256xbf16>
    %16 = vector.shape_cast %13 : vector<16x256xbf16> to vector<1x16x256xbf16>
    tpu.vector_store %arg5[%c0_9, %c0_10, %c0_11], %16 {strides = array<i32>} : memref<1x16x256xbf16, #tpu.memory_space<vmem>>, vector<1x16x256xbf16>,
    %cst_12 = arith.constant dense<0.000000e+00> : vector<16xf32>
    %17 = vector.multi_reduction <add>, %12, %cst_12 [1] : vector<16x256xf32> to vector<16xf32>
    %18 = vector.shape_cast %17 : vector<16xf32> to vector<16x1xf32>
    %19 = arith.mulf %12, %12 : vector<16x256xf32>
    %cst_13 = arith.constant dense<0.000000e+00> : vector<16xf32>
    %20 = vector.multi_reduction <add>, %19, %cst_13 [1] : vector<16x256xf32> to vector<16xf32>
    %21 = vector.shape_cast %20 : vector<16xf32> to vector<16x1xf32>
    %22 = tpu.concatenate %18, %21 in 1 : vector<16x1xf32>, vector<16x1xf32> -> vector<16x2xf32>
    %c0_14 = arith.constant 0 : index
    %c0_15 = arith.constant 0 : index
    %c0_16 = arith.constant 0 : index
    %23 = vector.load %arg6[%c0_14, %c0_15, %c0_16] : memref<1x16x2xf32, #tpu.memory_space<vmem>>, vector<1x16x2xf32>
    %24 = vector.shape_cast %23 : vector<1x16x2xf32> to vector<16x2xf32>
    %25 = vector.shape_cast %22 : vector<16x2xf32> to vector<1x16x2xf32>
    tpu.vector_store %arg6[%c0_14, %c0_15, %c0_16], %25 {strides = array<i32>} : memref<1x16x2xf32, #tpu.memory_space<vmem>>, vector<1x16x2xf32>,
    return
  }
  func.func @transform_0(%arg0: i32) -> (i32, i32, i32) {
    %c0_i32 = arith.constant 0 : i32
    %c0_i32_0 = arith.constant 0 : i32
    %c0_i32_1 = arith.constant 0 : i32
    return %arg0, %c0_i32, %c0_i32_0 : i32, i32, i32
  }
  func.func @transform_1(%arg0: i32) -> (i32, i32) {
    %c0_i32 = arith.constant 0 : i32
    %c0_i32_0 = arith.constant 0 : i32
    %c0_i32_1 = arith.constant 0 : i32
    return %c0_i32, %c0_i32_0 : i32, i32
  }
  func.func @transform_2(%arg0: i32) -> (i32, i32) {
    %c0_i32 = arith.constant 0 : i32
    %c0_i32_0 = arith.constant 0 : i32
    %c0_i32_1 = arith.constant 0 : i32
    return %c0_i32, %c0_i32_0 : i32, i32
  }
  func.func @transform_3(%arg0: i32) -> (i32, i32) {
    %c0_i32 = arith.constant 0 : i32
    %c0_i32_0 = arith.constant 0 : i32
    %c0_i32_1 = arith.constant 0 : i32
    return %c0_i32, %c0_i32_0 : i32, i32
  }
  func.func @transform_4(%arg0: i32) -> (i32, i32, i32) {
    %c0_i32 = arith.constant 0 : i32
    %c0_i32_0 = arith.constant 0 : i32
    %c0_i32_1 = arith.constant 0 : i32
    return %arg0, %c0_i32, %c0_i32_0 : i32, i32, i32
  }
  func.func @transform_5(%arg0: i32) -> (i32, i32, i32) {
    %c0_i32 = arith.constant 0 : i32
    %c0_i32_0 = arith.constant 0 : i32
    %c0_i32_1 = arith.constant 0 : i32
    return %arg0, %c0_i32, %c0_i32_0 : i32, i32, i32
  }
}

module attributes {stable_mosaic.version = 11 : i64} {
  func.func @bn2_conv2_concat_kernel(%arg0: i32, %arg1: memref<1x4x256xf32, #tpu.memory_space<vmem>>, %arg2: memref<1x16x256xbf16, #tpu.memory_space<vmem>>, %arg3: memref<16x1xf32, #tpu.memory_space<vmem>>, %arg4: memref<16x1xf32, #tpu.memory_space<vmem>>, %arg5: memref<3x4x48xbf16, #tpu.memory_space<vmem>>, %arg6: memref<9x256xf32, #tpu.memory_space<vmem>>, %arg7: memref<1x8x256xf32, #tpu.memory_space<vmem>>) attributes {dimension_semantics = [#tpu.dimension_semantics<parallel>], iteration_bounds = array<i64: 2>, scalar_prefetch = 0 : i64, scratch_operands = 0 : i64, tpu.core_type = #tpu.core_type<tc>, window_params = [{transform_indices = @transform_0, window_bounds = array<i64: 1, 4, 256>}, {transform_indices = @transform_1, window_bounds = array<i64: 1, 16, 256>}, {pipeline_mode = #tpu.pipeline_mode<synchronous>, transform_indices = @transform_2, window_bounds = array<i64: 16, 1>}, {pipeline_mode = #tpu.pipeline_mode<synchronous>, transform_indices = @transform_3, window_bounds = array<i64: 16, 1>}, {pipeline_mode = #tpu.pipeline_mode<synchronous>, transform_indices = @transform_4, window_bounds = array<i64: 3, 4, 48>}, {pipeline_mode = #tpu.pipeline_mode<synchronous>, transform_indices = @transform_5, window_bounds = array<i64: 9, 256>}, {transform_indices = @transform_6, window_bounds = array<i64: 1, 8, 256>}]} {
    %c0 = arith.constant 0 : index
    %c0_0 = arith.constant 0 : index
    %0 = vector.load %arg3[%c0, %c0_0] : memref<16x1xf32, #tpu.memory_space<vmem>>, vector<16x1xf32>
    %c0_1 = arith.constant 0 : index
    %c0_2 = arith.constant 0 : index
    %1 = vector.load %arg4[%c0_1, %c0_2] : memref<16x1xf32, #tpu.memory_space<vmem>>, vector<16x1xf32>
    %c0_3 = arith.constant 0 : index
    %c0_4 = arith.constant 0 : index
    %c0_5 = arith.constant 0 : index
    %2 = vector.load %arg5[%c0_3, %c0_4, %c0_5] : memref<3x4x48xbf16, #tpu.memory_space<vmem>>, vector<1x4x48xbf16>
    %3 = vector.shape_cast %2 : vector<1x4x48xbf16> to vector<4x48xbf16>
    %c1 = arith.constant 1 : index
    %c0_6 = arith.constant 0 : index
    %c0_7 = arith.constant 0 : index
    %4 = vector.load %arg5[%c1, %c0_6, %c0_7] : memref<3x4x48xbf16, #tpu.memory_space<vmem>>, vector<1x4x48xbf16>
    %5 = vector.shape_cast %4 : vector<1x4x48xbf16> to vector<4x48xbf16>
    %c2 = arith.constant 2 : index
    %c0_8 = arith.constant 0 : index
    %c0_9 = arith.constant 0 : index
    %6 = vector.load %arg5[%c2, %c0_8, %c0_9] : memref<3x4x48xbf16, #tpu.memory_space<vmem>>, vector<1x4x48xbf16>
    %7 = vector.shape_cast %6 : vector<1x4x48xbf16> to vector<4x48xbf16>
    %c0_10 = arith.constant 0 : index
    %c0_11 = arith.constant 0 : index
    %8 = vector.load %arg6[%c0_10, %c0_11] : memref<9x256xf32, #tpu.memory_space<vmem>>, vector<1x256xf32>
    %c1_12 = arith.constant 1 : index
    %c0_13 = arith.constant 0 : index
    %9 = vector.load %arg6[%c1_12, %c0_13] : memref<9x256xf32, #tpu.memory_space<vmem>>, vector<1x256xf32>
    %c2_14 = arith.constant 2 : index
    %c0_15 = arith.constant 0 : index
    %10 = vector.load %arg6[%c2_14, %c0_15] : memref<9x256xf32, #tpu.memory_space<vmem>>, vector<1x256xf32>
    %c3 = arith.constant 3 : index
    %c0_16 = arith.constant 0 : index
    %11 = vector.load %arg6[%c3, %c0_16] : memref<9x256xf32, #tpu.memory_space<vmem>>, vector<1x256xf32>
    %c5 = arith.constant 5 : index
    %c0_17 = arith.constant 0 : index
    %12 = vector.load %arg6[%c5, %c0_17] : memref<9x256xf32, #tpu.memory_space<vmem>>, vector<1x256xf32>
    %c6 = arith.constant 6 : index
    %c0_18 = arith.constant 0 : index
    %13 = vector.load %arg6[%c6, %c0_18] : memref<9x256xf32, #tpu.memory_space<vmem>>, vector<1x256xf32>
    %c7 = arith.constant 7 : index
    %c0_19 = arith.constant 0 : index
    %14 = vector.load %arg6[%c7, %c0_19] : memref<9x256xf32, #tpu.memory_space<vmem>>, vector<1x256xf32>
    %c8 = arith.constant 8 : index
    %c0_20 = arith.constant 0 : index
    %15 = vector.load %arg6[%c8, %c0_20] : memref<9x256xf32, #tpu.memory_space<vmem>>, vector<1x256xf32>
    %c0_21 = arith.constant 0 : index
    %c0_22 = arith.constant 0 : index
    %c0_23 = arith.constant 0 : index
    %16 = vector.load %arg2[%c0_21, %c0_22, %c0_23] : memref<1x16x256xbf16, #tpu.memory_space<vmem>>, vector<1x16x256xbf16>
    %17 = vector.shape_cast %16 : vector<1x16x256xbf16> to vector<16x256xbf16>
    %18 = arith.extf %17 : vector<16x256xbf16> to vector<16x256xf32>
    %19 = vector.broadcast %0 : vector<16x1xf32> to vector<16x256xf32>
    %20 = arith.mulf %18, %19 : vector<16x256xf32>
    %21 = vector.broadcast %1 : vector<16x1xf32> to vector<16x256xf32>
    %22 = arith.addf %20, %21 : vector<16x256xf32>
    %cst = arith.constant 0.000000e+00 : f32
    %23 = vector.broadcast %cst : f32 to vector<16x256xf32>
    %24 = arith.maximumf %22, %23 : vector<16x256xf32>
    %cst_24 = arith.constant 0.000000e+00 : f32
    %25 = vector.broadcast %cst_24 : f32 to vector<4x256xf32>
    %c17_i32 = arith.constant 17 : i32
    %26 = tpu.dynamic_rotate %24 by %c17_i32 dim 1 : vector<16x256xf32>, i32 -> vector<16x256xf32>
    %27 = vector.broadcast %8 : vector<1x256xf32> to vector<16x256xf32>
    %28 = arith.mulf %26, %27 : vector<16x256xf32>
    %29 = arith.truncf %28 : vector<16x256xf32> to vector<16x256xbf16>
    %c16_i32 = arith.constant 16 : i32
    %30 = tpu.dynamic_rotate %24 by %c16_i32 dim 1 : vector<16x256xf32>, i32 -> vector<16x256xf32>
    %31 = vector.broadcast %9 : vector<1x256xf32> to vector<16x256xf32>
    %32 = arith.mulf %30, %31 : vector<16x256xf32>
    %33 = arith.truncf %32 : vector<16x256xf32> to vector<16x256xbf16>
    %c15_i32 = arith.constant 15 : i32
    %34 = tpu.dynamic_rotate %24 by %c15_i32 dim 1 : vector<16x256xf32>, i32 -> vector<16x256xf32>
    %35 = vector.broadcast %10 : vector<1x256xf32> to vector<16x256xf32>
    %36 = arith.mulf %34, %35 : vector<16x256xf32>
    %37 = arith.truncf %36 : vector<16x256xf32> to vector<16x256xbf16>
    %38 = tpu.concatenate %29, %33, %37 in 0 : vector<16x256xbf16>, vector<16x256xbf16>, vector<16x256xbf16> -> vector<48x256xbf16>
    %cst_25 = arith.constant dense<0.000000e+00> : vector<4x256xf32>
    %39 = tpu.matmul %3, %38, %cst_25 {dimension_numbers = #tpu.dot_dimension_numbers<[1], [0], [0], [1], [0, 0, 1, 1], [], []>} : vector<4x48xbf16>, vector<48x256xbf16>, vector<4x256xf32> -> vector<4x256xf32>
    %40 = arith.addf %25, %39 : vector<4x256xf32>
    %c1_i32 = arith.constant 1 : i32
    %41 = tpu.dynamic_rotate %24 by %c1_i32 dim 1 : vector<16x256xf32>, i32 -> vector<16x256xf32>
    %42 = vector.broadcast %11 : vector<1x256xf32> to vector<16x256xf32>
    %43 = arith.mulf %41, %42 : vector<16x256xf32>
    %44 = arith.truncf %43 : vector<16x256xf32> to vector<16x256xbf16>
    %45 = arith.truncf %24 : vector<16x256xf32> to vector<16x256xbf16>
    %c255_i32 = arith.constant 255 : i32
    %46 = tpu.dynamic_rotate %24 by %c255_i32 dim 1 : vector<16x256xf32>, i32 -> vector<16x256xf32>
    %47 = vector.broadcast %12 : vector<1x256xf32> to vector<16x256xf32>
    %48 = arith.mulf %46, %47 : vector<16x256xf32>
    %49 = arith.truncf %48 : vector<16x256xf32> to vector<16x256xbf16>
    %50 = tpu.concatenate %44, %45, %49 in 0 : vector<16x256xbf16>, vector<16x256xbf16>, vector<16x256xbf16> -> vector<48x256xbf16>
    %cst_26 = arith.constant dense<0.000000e+00> : vector<4x256xf32>
    %51 = tpu.matmul %5, %50, %cst_26 {dimension_numbers = #tpu.dot_dimension_numbers<[1], [0], [0], [1], [0, 0, 1, 1], [], []>} : vector<4x48xbf16>, vector<48x256xbf16>, vector<4x256xf32> -> vector<4x256xf32>
    %52 = arith.addf %40, %51 : vector<4x256xf32>
    %c241_i32 = arith.constant 241 : i32
    %53 = tpu.dynamic_rotate %24 by %c241_i32 dim 1 : vector<16x256xf32>, i32 -> vector<16x256xf32>
    %54 = vector.broadcast %13 : vector<1x256xf32> to vector<16x256xf32>
    %55 = arith.mulf %53, %54 : vector<16x256xf32>
    %56 = arith.truncf %55 : vector<16x256xf32> to vector<16x256xbf16>
    %c240_i32 = arith.constant 240 : i32
    %57 = tpu.dynamic_rotate %24 by %c240_i32 dim 1 : vector<16x256xf32>, i32 -> vector<16x256xf32>
    %58 = vector.broadcast %14 : vector<1x256xf32> to vector<16x256xf32>
    %59 = arith.mulf %57, %58 : vector<16x256xf32>
    %60 = arith.truncf %59 : vector<16x256xf32> to vector<16x256xbf16>
    %c239_i32 = arith.constant 239 : i32
    %61 = tpu.dynamic_rotate %24 by %c239_i32 dim 1 : vector<16x256xf32>, i32 -> vector<16x256xf32>
    %62 = vector.broadcast %15 : vector<1x256xf32> to vector<16x256xf32>
    %63 = arith.mulf %61, %62 : vector<16x256xf32>
    %64 = arith.truncf %63 : vector<16x256xf32> to vector<16x256xbf16>
    %65 = tpu.concatenate %56, %60, %64 in 0 : vector<16x256xbf16>, vector<16x256xbf16>, vector<16x256xbf16> -> vector<48x256xbf16>
    %cst_27 = arith.constant dense<0.000000e+00> : vector<4x256xf32>
    %66 = tpu.matmul %7, %65, %cst_27 {dimension_numbers = #tpu.dot_dimension_numbers<[1], [0], [0], [1], [0, 0, 1, 1], [], []>} : vector<4x48xbf16>, vector<48x256xbf16>, vector<4x256xf32> -> vector<4x256xf32>
    %67 = arith.addf %52, %66 : vector<4x256xf32>
    %c0_28 = arith.constant 0 : index
    %c0_29 = arith.constant 0 : index
    %c0_30 = arith.constant 0 : index
    %68 = vector.load %arg1[%c0_28, %c0_29, %c0_30] : memref<1x4x256xf32, #tpu.memory_space<vmem>>, vector<1x4x256xf32>
    %69 = vector.shape_cast %68 : vector<1x4x256xf32> to vector<4x256xf32>
    %c0_31 = arith.constant 0 : index
    %c0_32 = arith.constant 0 : index
    %c0_33 = arith.constant 0 : index
    %70 = vector.load %arg7[%c0_31, %c0_32, %c0_33] : memref<1x8x256xf32, #tpu.memory_space<vmem>>, vector<1x4x256xf32>
    %71 = vector.shape_cast %70 : vector<1x4x256xf32> to vector<4x256xf32>
    %72 = vector.shape_cast %69 : vector<4x256xf32> to vector<1x4x256xf32>
    tpu.vector_store %arg7[%c0_31, %c0_32, %c0_33], %72 {strides = array<i32>} : memref<1x8x256xf32, #tpu.memory_space<vmem>>, vector<1x4x256xf32>,
    %c0_34 = arith.constant 0 : index
    %c4 = arith.constant 4 : index
    %c0_35 = arith.constant 0 : index
    %73 = vector.load %arg7[%c0_34, %c4, %c0_35] : memref<1x8x256xf32, #tpu.memory_space<vmem>>, vector<1x4x256xf32>
    %74 = vector.shape_cast %73 : vector<1x4x256xf32> to vector<4x256xf32>
    %75 = vector.shape_cast %67 : vector<4x256xf32> to vector<1x4x256xf32>
    tpu.vector_store %arg7[%c0_34, %c4, %c0_35], %75 {strides = array<i32>} : memref<1x8x256xf32, #tpu.memory_space<vmem>>, vector<1x4x256xf32>,
    return
  }
  func.func @transform_0(%arg0: i32) -> (i32, i32, i32) {
    %c0_i32 = arith.constant 0 : i32
    %c0_i32_0 = arith.constant 0 : i32
    %c0_i32_1 = arith.constant 0 : i32
    return %arg0, %c0_i32, %c0_i32_0 : i32, i32, i32
  }
  func.func @transform_1(%arg0: i32) -> (i32, i32, i32) {
    %c0_i32 = arith.constant 0 : i32
    %c0_i32_0 = arith.constant 0 : i32
    %c0_i32_1 = arith.constant 0 : i32
    return %arg0, %c0_i32, %c0_i32_0 : i32, i32, i32
  }
  func.func @transform_2(%arg0: i32) -> (i32, i32) {
    %c0_i32 = arith.constant 0 : i32
    %c0_i32_0 = arith.constant 0 : i32
    %c0_i32_1 = arith.constant 0 : i32
    return %c0_i32, %c0_i32_0 : i32, i32
  }
  func.func @transform_3(%arg0: i32) -> (i32, i32) {
    %c0_i32 = arith.constant 0 : i32
    %c0_i32_0 = arith.constant 0 : i32
    %c0_i32_1 = arith.constant 0 : i32
    return %c0_i32, %c0_i32_0 : i32, i32
  }
  func.func @transform_4(%arg0: i32) -> (i32, i32, i32) {
    %c0_i32 = arith.constant 0 : i32
    %c0_i32_0 = arith.constant 0 : i32
    %c0_i32_1 = arith.constant 0 : i32
    %c0_i32_2 = arith.constant 0 : i32
    return %c0_i32, %c0_i32_0, %c0_i32_1 : i32, i32, i32
  }
  func.func @transform_5(%arg0: i32) -> (i32, i32) {
    %c0_i32 = arith.constant 0 : i32
    %c0_i32_0 = arith.constant 0 : i32
    %c0_i32_1 = arith.constant 0 : i32
    return %c0_i32, %c0_i32_0 : i32, i32
  }
  func.func @transform_6(%arg0: i32) -> (i32, i32, i32) {
    %c0_i32 = arith.constant 0 : i32
    %c0_i32_0 = arith.constant 0 : i32
    %c0_i32_1 = arith.constant 0 : i32
    return %arg0, %c0_i32, %c0_i32_0 : i32, i32, i32
  }
}

</mosaic_0001>

<llo_original>
// kernel: gen_bottleneck.3
$region0: #{gen_bottleneck.3}
  #allocation0 [shape = 'u32[]', space=smem, size = 0x4, offset = 0x4, fixed_abs, tag = 'smem constant byte address 0x4 - core index']
  #allocation1 [shape = 'u32[144,128]{1,0:T(1,128)}', space=vmem, size = 0x12000, scoped, tag = 'internal scratch']
  %s0 = inlined_call_operand.vmem [shape: f32[2,4,256], index: 0, kind: input, shape index: {}]
  %s1 = inlined_call_operand.vmem [shape: bf16[2,16,256], index: 1, kind: input, shape index: {}]
  %s2 = inlined_call_operand.vmem [shape: f32[16,1], index: 2, kind: input, shape index: {}]
  %s3 = inlined_call_operand.vmem [shape: f32[16,1], index: 3, kind: input, shape index: {}]
  %s4 = inlined_call_operand.vmem [shape: bf16[3,4,48], index: 4, kind: input, shape index: {}]
  %s5 = inlined_call_operand.vmem [shape: f32[9,256], index: 5, kind: input, shape index: {}]
  %s6 = inlined_call_operand.vmem [shape: f32[2,8,256], index: 6, kind: output, shape index: {}]
  %s7 = sld [smem:[#allocation0]]
  $region57: #{gen_bottleneck.3} parent=0
    _
  %s9 = ssub.s32 1, %s7
  %s10 = scalar_select 0, %s9, %s7
  loop: start=0, step=1, limit=4
  $region2: #{gen_bottleneck.3} parent=0 // loop_pre_header
    _
  $region3: #{gen_bottleneck.3} parent=0 // loop_header
    %s12 = sphi 0, %s16
    %p13 = scmp.ge.s32.totalorder %s12, 4
    %s22 = sphi 0, %s24
    %s25 = sphi 0, %s22
    %s26 = sphi 0, %s25
    %s42 = sphi 0, %s26
    %s48 = sphi 0, %s50
    %s51 = sphi 0, %s48
    %s52 = sphi 0, %s51
    %s68 = sphi 0, %s52
    %s72 = sphi 0, %s72
    %s74 = sphi 0, %s72
    %s75 = sphi 0, %s74
    %s89 = sphi 0, %s75
    %s93 = sphi 0, %s93
    %s95 = sphi 0, %s93
    %s96 = sphi 0, %s95
    %s110 = sphi 0, %s96
    %s114 = sphi 0, %s114
    %s116 = sphi 0, %s114
    %s117 = sphi 0, %s116
    %s131 = sphi 0, %s117
    %s135 = sphi 0, %s135
    %s137 = sphi 0, %s135
    %s138 = sphi 0, %s137
    %s152 = sphi 0, %s138
    %s158 = sphi 0, %s160
    %s161 = sphi 0, %s158
    %s162 = sphi 0, %s161
    %s178 = sphi 0, %s162
  $region4: #{gen_bottleneck.3} parent=0 // loop_header_branch
    %15 = sbr.rel (%p13) target = $region8
  $region5: #{gen_bottleneck.3} parent=0 // loop_body
    %s17 = ssub.s32 %s12, 1
    %s18 = ssub.s32 %s12, 2
    %s19 = sadd.s32 %s12, 1
    %s20 = ssub.s32 %s12, %s19
    %p21 = scmp.eq.s32.totalorder %s20, 0
    %s23 = sadd.s32 %s22, 1
    %s24 = scalar_select %p21, %s22, %s23
    %p27 = pneg %p21
    %p28 = scmp.eq.s32.totalorder %s12, 1
    %p29 = por %p27, %p28
    %p30 = scmp.ne.s32.totalorder %s22, %s25
    %p31 = scmp.eq.s32.totalorder %s12, 0
    %p32 = por %p30, %p31
    %p33 = scmp.ne.s32.totalorder %s22, %s25
    %p34 = scmp.eq.s32.totalorder %s17, 1
    %p35 = por %p33, %p34
    %p36 = scmp.ne.s32.totalorder %s25, %s26
    %p37 = scmp.eq.s32.totalorder %s17, 0
    %p38 = por %p36, %p37
    %p39 = scmp.ne.s32.totalorder %s25, %s26
    %p40 = scmp.eq.s32.totalorder %s18, 1
    %p41 = por %p39, %p40
    %p43 = scmp.ne.s32.totalorder %s26, %s42
    %p44 = scmp.eq.s32.totalorder %s18, 0
    %p45 = por %p43, %p44
    %s46 = ssub.s32 %s12, %s19
    %p47 = scmp.eq.s32.totalorder %s46, 0
    %s49 = sadd.s32 %s48, 1
    %s50 = scalar_select %p47, %s48, %s49
    %p53 = pneg %p47
    %p54 = scmp.eq.s32.totalorder %s12, 1
    %p55 = por %p53, %p54
    %p56 = scmp.ne.s32.totalorder %s48, %s51
    %p57 = scmp.eq.s32.totalorder %s12, 0
    %p58 = por %p56, %p57
    %p59 = scmp.ne.s32.totalorder %s48, %s51
    %p60 = scmp.eq.s32.totalorder %s17, 1
    %p61 = por %p59, %p60
    %p62 = scmp.ne.s32.totalorder %s51, %s52
    %p63 = scmp.eq.s32.totalorder %s17, 0
    %p64 = por %p62, %p63
    %p65 = scmp.ne.s32.totalorder %s51, %s52
    %p66 = scmp.eq.s32.totalorder %s18, 1
    %p67 = por %p65, %p66
    %p69 = scmp.ne.s32.totalorder %s52, %s68
    %p70 = scmp.eq.s32.totalorder %s18, 0
    %p71 = por %p69, %p70
    %s73 = sadd.s32 %s72, 1
    %p76 = scmp.eq.s32.totalorder %s12, 1
    %p77 = scmp.ne.s32.totalorder %s72, %s74
    %p78 = scmp.eq.s32.totalorder %s12, 0
    %p79 = por %p77, %p78
    %p80 = scmp.ne.s32.totalorder %s72, %s74
    %p81 = scmp.eq.s32.totalorder %s17, 1
    %p82 = por %p80, %p81
    %p83 = scmp.ne.s32.totalorder %s74, %s75
    %p84 = scmp.eq.s32.totalorder %s17, 0
    %p85 = por %p83, %p84
    %p86 = scmp.ne.s32.totalorder %s74, %s75
    %p87 = scmp.eq.s32.totalorder %s18, 1
    %p88 = por %p86, %p87
    %p90 = scmp.ne.s32.totalorder %s75, %s89
    %p91 = scmp.eq.s32.totalorder %s18, 0
    %p92 = por %p90, %p91
    %s94 = sadd.s32 %s93, 1
    %p97 = scmp.eq.s32.totalorder %s12, 1
    %p98 = scmp.ne.s32.totalorder %s93, %s95
    %p99 = scmp.eq.s32.totalorder %s12, 0
    %p100 = por %p98, %p99
    %p101 = scmp.ne.s32.totalorder %s93, %s95
    %p102 = scmp.eq.s32.totalorder %s17, 1
    %p103 = por %p101, %p102
    %p104 = scmp.ne.s32.totalorder %s95, %s96
    %p105 = scmp.eq.s32.totalorder %s17, 0
    %p106 = por %p104, %p105
    %p107 = scmp.ne.s32.totalorder %s95, %s96
    %p108 = scmp.eq.s32.totalorder %s18, 1
    %p109 = por %p107, %p108
    %p111 = scmp.ne.s32.totalorder %s96, %s110
    %p112 = scmp.eq.s32.totalorder %s18, 0
    %p113 = por %p111, %p112
    %s115 = sadd.s32 %s114, 1
    %p118 = scmp.eq.s32.totalorder %s12, 1
    %p119 = scmp.ne.s32.totalorder %s114, %s116
    %p120 = scmp.eq.s32.totalorder %s12, 0
    %p121 = por %p119, %p120
    %p122 = scmp.ne.s32.totalorder %s114, %s116
    %p123 = scmp.eq.s32.totalorder %s17, 1
    %p124 = por %p122, %p123
    %p125 = scmp.ne.s32.totalorder %s116, %s117
    %p126 = scmp.eq.s32.totalorder %s17, 0
    %p127 = por %p125, %p126
    %p128 = scmp.ne.s32.totalorder %s116, %s117
    %p129 = scmp.eq.s32.totalorder %s18, 1
    %p130 = por %p128, %p129
    %p132 = scmp.ne.s32.totalorder %s117, %s131
    %p133 = scmp.eq.s32.totalorder %s18, 0
    %p134 = por %p132, %p133
    %s136 = sadd.s32 %s135, 1
    %p139 = scmp.eq.s32.totalorder %s12, 1
    %p140 = scmp.ne.s32.totalorder %s135, %s137
    %p141 = scmp.eq.s32.totalorder %s12, 0
    %p142 = por %p140, %p141
    %p143 = scmp.ne.s32.totalorder %s135, %s137
    %p144 = scmp.eq.s32.totalorder %s17, 1
    %p145 = por %p143, %p144
    %p146 = scmp.ne.s32.totalorder %s137, %s138
    %p147 = scmp.eq.s32.totalorder %s17, 0
    %p148 = por %p146, %p147
    %p149 = scmp.ne.s32.totalorder %s137, %s138
    %p150 = scmp.eq.s32.totalorder %s18, 1
    %p151 = por %p149, %p150
    %p153 = scmp.ne.s32.totalorder %s138, %s152
    %p154 = scmp.eq.s32.totalorder %s18, 0
    %p155 = por %p153, %p154
    %s156 = ssub.s32 %s12, %s19
    %p157 = scmp.eq.s32.totalorder %s156, 0
    %s159 = sadd.s32 %s158, 1
    %s160 = scalar_select %p157, %s158, %s159
    %p163 = pneg %p157
    %p164 = scmp.eq.s32.totalorder %s12, 1
    %p165 = por %p163, %p164
    %p166 = scmp.ne.s32.totalorder %s158, %s161
    %p167 = scmp.eq.s32.totalorder %s12, 0
    %p168 = por %p166, %p167
    %p169 = scmp.ne.s32.totalorder %s158, %s161
    %p170 = scmp.eq.s32.totalorder %s17, 1
    %p171 = por %p169, %p170
    %p172 = scmp.ne.s32.totalorder %s161, %s162
    %p173 = scmp.eq.s32.totalorder %s17, 0
    %p174 = por %p172, %p173
    %p175 = scmp.ne.s32.totalorder %s161, %s162
    %p176 = scmp.eq.s32.totalorder %s18, 1
    %p177 = por %p175, %p176
    %p179 = scmp.ne.s32.totalorder %s162, %s178
    %p180 = scmp.eq.s32.totalorder %s18, 0
    %p181 = por %p179, %p180
    %p182 = scmp.le.s32.totalorder 1, %s12
    %p183 = scmp.lt.s32.totalorder %s12, 3
    %p184 = pnand %p182, %p183
    %p185 = pneg %p184
    // Predicated region
    $region9: #{gen_bottleneck.3} parent=5 // pred_check
      _
    $region10: #{gen_bottleneck.3} parent=5 // pred_check_branch
      %187 = sbr.rel (%p184) target = $region12
    $region11: #{gen_bottleneck.3} parent=5 // pred_region
      %s188 = ssub.s32 %s12, 1
      // Predicated region
      $region13: #{gen_bottleneck.3} parent=11 // pred_check
        %p189 = pneg %p85
      $region14: #{gen_bottleneck.3} parent=11 // pred_check_branch
        %191 = sbr.rel (%p189) target = $region16
      $region15: #{gen_bottleneck.3} parent=11 // pred_region
        _
      $region16: #{gen_bottleneck.3} parent=11 // pred_fallthru
        _
      // Predicated region
      $region17: #{gen_bottleneck.3} parent=11 // pred_check
        %p192 = pneg %p106
      $region18: #{gen_bottleneck.3} parent=11 // pred_check_branch
        %194 = sbr.rel (%p192) target = $region20
      $region19: #{gen_bottleneck.3} parent=11 // pred_region
        _
      $region20: #{gen_bottleneck.3} parent=11 // pred_fallthru
        _
      // Predicated region
      $region21: #{gen_bottleneck.3} parent=11 // pred_check
        %p195 = pneg %p127
      $region22: #{gen_bottleneck.3} parent=11 // pred_check_branch
        %197 = sbr.rel (%p195) target = $region24
      $region23: #{gen_bottleneck.3} parent=11 // pred_region
        _
      $region24: #{gen_bottleneck.3} parent=11 // pred_fallthru
        _
      // Predicated region
      $region25: #{gen_bottleneck.3} parent=11 // pred_check
        %p198 = pneg %p148
      $region26: #{gen_bottleneck.3} parent=11 // pred_check_branch
        %200 = sbr.rel (%p198) target = $region28
      $region27: #{gen_bottleneck.3} parent=11 // pred_region
        _
      $region28: #{gen_bottleneck.3} parent=11 // pred_fallthru
        _
    $region12: #{gen_bottleneck.3} parent=5 // pred_fallthru
      _
    %p201 = scmp.lt.s32.totalorder %s12, 2
    // Predicated region
    $region29: #{gen_bottleneck.3} parent=5 // pred_check
      %p202 = pneg %p201
    $region30: #{gen_bottleneck.3} parent=5 // pred_check_branch
      %204 = sbr.rel (%p202) target = $region32
    $region31: #{gen_bottleneck.3} parent=5 // pred_region
      // Predicated region
      $region33: #{gen_bottleneck.3} parent=31 // pred_check
        %p205 = pneg %p32
      $region34: #{gen_bottleneck.3} parent=31 // pred_check_branch
        %207 = sbr.rel (%p205) target = $region36
      $region35: #{gen_bottleneck.3} parent=31 // pred_region
        %p208 = scmp.lt.s32.totalorder %s12, 1
        %s209 = scalar_select %p208, %s12, 1
        %s210 = smul.addr %s209, 2
        %s211 = smul.addr %s210, 4
        %s212 = scalar_lea.vmem %s0, %s211
      $region36: #{gen_bottleneck.3} parent=31 // pred_fallthru
        _
      // Predicated region
      $region37: #{gen_bottleneck.3} parent=31 // pred_check
        %p213 = pneg %p58
      $region38: #{gen_bottleneck.3} parent=31 // pred_check_branch
        %215 = sbr.rel (%p213) target = $region40
      $region39: #{gen_bottleneck.3} parent=31 // pred_region
        %p216 = scmp.lt.s32.totalorder %s12, 1
        %s217 = scalar_select %p216, %s12, 1
        %s218 = smul.addr %s217, 4
        %s219 = smul.addr %s218, 4
        %s220 = scalar_lea.vmem %s1, %s219
      $region40: #{gen_bottleneck.3} parent=31 // pred_fallthru
        _
    $region32: #{gen_bottleneck.3} parent=5 // pred_fallthru
      _
    %p221 = scmp.le.s32.totalorder 1, %s12
    %p222 = scmp.lt.s32.totalorder %s12, 3
    %p223 = pnand %p221, %p222
    %p224 = pneg %p223
    // Predicated region
    $region41: #{gen_bottleneck.3} parent=5 // pred_check
      _
    $region42: #{gen_bottleneck.3} parent=5 // pred_check_branch
      %226 = sbr.rel (%p223) target = $region44
    $region43: #{gen_bottleneck.3} parent=5 // pred_region
      %s227 = ssub.s32 %s12, 1
      %p228 = scmp.lt.s32.totalorder %s17, 1
      %s229 = scalar_select %p228, %s17, 1
      %s230 = smul.addr %s229, 2
      %s231 = smul.addr %s230, 4
      %s232 = scalar_lea.vmem %s0, %s231
      %p233 = pneg %p38
      %p234 = pneg %p35
      %p235 = scmp.lt.s32.totalorder %s17, 1
      %s236 = scalar_select %p235, %s17, 1
      %s237 = smul.addr %s236, 4
      %s238 = smul.addr %s237, 4
      %s239 = scalar_lea.vmem %s1, %s238
      %p240 = pneg %p64
      %p241 = pneg %p61
      %p242 = pneg %p85
      %p243 = pneg %p82
      %p244 = pneg %p106
      %p245 = pneg %p103
      %p246 = pneg %p127
      %p247 = pneg %p124
      %p248 = pneg %p148
      %p249 = pneg %p145
      %p250 = pneg %p174
      %p251 = pneg %p171
      %p252 = scmp.lt.s32.totalorder %s17, 1
      %s253 = scalar_select %p252, %s17, 1
      %s254 = smul.addr %s253, 2
      %s255 = smul.addr %s254, 8
      %s256 = scalar_lea.vmem %s6, %s255
      %p257 = scmp.lt.s32.totalorder %s17, 1
      %s258 = scalar_select %p257, %s17, 1
      %s259 = smul.addr %s258, 2
      %s260 = smul.addr %s259, 4
      %s261 = scalar_lea.vmem %s0, %s260
      %p262 = scmp.lt.s32.totalorder %s17, 1
      %s263 = scalar_select %p262, %s17, 1
      %s264 = smul.addr %s263, 4
      %s265 = smul.addr %s264, 4
      %s266 = scalar_lea.vmem %s1, %s265
      %p267 = scmp.lt.s32.totalorder %s17, 1
      %s268 = scalar_select %p267, %s17, 1
      %s269 = smul.addr %s268, 2
      %s270 = smul.addr %s269, 8
      %s271 = scalar_lea.vmem %s6, %s270
      %v273 = vld [vmem:[%s2] sm:$0xff]
      %v274 = vld [vmem:[%s2 + $0x8] sm:$0xff]
      %v275 = vld [vmem:[%s3] sm:$0xff]
      %v276 = vld [vmem:[%s3 + $0x8] sm:$0xff]
      %v277 = vld [vmem:[%s4] sm:$0x3]
      %s278 = scalar_lea.vmem %s4, 2
      %v279 = vld [vmem:[%s278] sm:$0x3]
      %s280 = scalar_lea.vmem %s4, 4
      %v281 = vld [vmem:[%s280] sm:$0x3]
      %v282 = vld [vmem:[%s5] ss:$8 sm:$0x3]
      %s283 = scalar_lea.vmem %s5, 1
      %v284 = vld [vmem:[%s283] ss:$8 sm:$0x3]
      %s285 = scalar_lea.vmem %s5, 2
      %v286 = vld [vmem:[%s285] ss:$8 sm:$0x3]
      %s287 = scalar_lea.vmem %s5, 3
      %v288 = vld [vmem:[%s287] ss:$8 sm:$0x3]
      %s289 = scalar_lea.vmem %s5, 5
      %v290 = vld [vmem:[%s289] ss:$8 sm:$0x3]
      %s291 = scalar_lea.vmem %s5, 6
      %v292 = vld [vmem:[%s291] ss:$8 sm:$0x3]
      %s293 = scalar_lea.vmem %s5, 7
      %v294 = vld [vmem:[%s293] ss:$8 sm:$0x3]
      %s295 = scalar_lea.vmem %s5, 16
      %v296 = vld [vmem:[%s295] ss:$8 sm:$0x3]
      %v297 = vld [vmem:[%s266] sm:$0xff]
      %v298 = vld [vmem:[%s266 + $0x8] sm:$0xff]
      %v299 = vunpack.c.l.bf16 %v297
      %v300 = vunpack.c.h.bf16 %v297
      %v301 = vunpack.c.l.bf16 %v298
      %v302 = vunpack.c.h.bf16 %v298
      %304 = vset.pattern.permute.xlu0 0
      %305 = vperm.xlu0 %304, %v273
      %v306 = vpop.permute.xlu0 %305
      %309 = vset.pattern.permute.xlu0 0
      %310 = vperm.xlu0 %309, %v274
      %v311 = vpop.permute.xlu0 %310
      %v313 = vmul.f32 %v299, %v306
      %v314 = vmul.f32 %v300, %v306
      %v315 = vmul.f32 %v301, %v311
      %v316 = vmul.f32 %v302, %v311
      %318 = vset.pattern.permute.xlu0 0
      %319 = vperm.xlu0 %318, %v275
      %v320 = vpop.permute.xlu0 %319
      %323 = vset.pattern.permute.xlu0 0
      %324 = vperm.xlu0 %323, %v276
      %v325 = vpop.permute.xlu0 %324
      %v327 = vadd.f32 %v313, %v320
      %v328 = vadd.f32 %v314, %v320
      %v329 = vadd.f32 %v315, %v325
      %v330 = vadd.f32 %v316, %v325
      %v331 = vmax.f32 %v327, 0.0
      %v332 = vmax.f32 %v328, 0.0
      %v333 = vmax.f32 %v329, 0.0
      %v334 = vmax.f32 %v330, 0.0
      %335 = vrot.lane.b32.xlu0 %v331, 17
      %v336 = vpop.permute.xlu0 %335
      %337 = vrot.lane.b32.xlu0 %v333, 17
      %v338 = vpop.permute.xlu0 %337
      %339 = vrot.lane.b32.xlu0 %v332, 17
      %v340 = vpop.permute.xlu0 %339
      %341 = vrot.lane.b32.xlu0 %v334, 17
      %v342 = vpop.permute.xlu0 %341
      %v343 = vlaneseq
      %v344 = vand.u32 %v343, 127
      %vm345 = vcmp.lt.s32.totalorder %v344, 17
      %v346 = vsel %vm345, %v336, %v340
      %v347 = vsel %vm345, %v338, %v342
      %v348 = vsel %vm345, %v340, %v336
      %v349 = vsel %vm345, %v342, %v338
      %v351 = vlaneseq
      %v352 = vshrl.u32 %v351, 7
      %v353 = vsub.s32 0, %v352
      %v354 = vrot.slane %v282, %v353
      %v355 = vlaneseq
      %v356 = vshrl.u32 %v355, 7
      %v357 = vsub.s32 1, %v356
      %v358 = vrot.slane %v282, %v357
      %v361 = vmul.f32 %v348, %v354
      %v362 = vmul.f32 %v346, %v358
      %v363 = vmul.f32 %v349, %v354
      %v364 = vmul.f32 %v347, %v358
      %v365 = vpack.c.bf16 %v363, %v361
      %v366 = vpack.c.bf16 %v364, %v362
      %367 = vrot.lane.b32.xlu0 %v331, 16
      %v368 = vpop.permute.xlu0 %367
      %369 = vrot.lane.b32.xlu0 %v333, 16
      %v370 = vpop.permute.xlu0 %369
      %371 = vrot.lane.b32.xlu0 %v332, 16
      %v372 = vpop.permute.xlu0 %371
      %373 = vrot.lane.b32.xlu0 %v334, 16
      %v374 = vpop.permute.xlu0 %373
      %vm375 = vcmp.lt.s32.totalorder %v344, 16
      %v376 = vsel %vm375, %v368, %v372
      %v377 = vsel %vm375, %v370, %v374
      %v378 = vsel %vm375, %v372, %v368
      %v379 = vsel %vm375, %v374, %v370
      %v381 = vlaneseq
      %v382 = vshrl.u32 %v381, 7
      %v383 = vsub.s32 0, %v382
      %v384 = vrot.slane %v284, %v383
      %v385 = vlaneseq
      %v386 = vshrl.u32 %v385, 7
      %v387 = vsub.s32 1, %v386
      %v388 = vrot.slane %v284, %v387
      %v391 = vmul.f32 %v378, %v384
      %v392 = vmul.f32 %v376, %v388
      %v393 = vmul.f32 %v379, %v384
      %v394 = vmul.f32 %v377, %v388
      %v395 = vpack.c.bf16 %v393, %v391
      %v396 = vpack.c.bf16 %v394, %v392
      %397 = vrot.lane.b32.xlu0 %v331, 15
      %v398 = vpop.permute.xlu0 %397
      %399 = vrot.lane.b32.xlu0 %v333, 15
      %v400 = vpop.permute.xlu0 %399
      %401 = vrot.lane.b32.xlu0 %v332, 15
      %v402 = vpop.permute.xlu0 %401
      %403 = vrot.lane.b32.xlu0 %v334, 15
      %v404 = vpop.permute.xlu0 %403
      %vm405 = vcmp.lt.s32.totalorder %v344, 15
      %v406 = vsel %vm405, %v398, %v402
      %v407 = vsel %vm405, %v400, %v404
      %v408 = vsel %vm405, %v402, %v398
      %v409 = vsel %vm405, %v404, %v400
      %v411 = vlaneseq
      %v412 = vshrl.u32 %v411, 7
      %v413 = vsub.s32 0, %v412
      %v414 = vrot.slane %v286, %v413
      %v415 = vlaneseq
      %v416 = vshrl.u32 %v415, 7
      %v417 = vsub.s32 1, %v416
      %v418 = vrot.slane %v286, %v417
      %v421 = vmul.f32 %v408, %v414
      %v422 = vmul.f32 %v406, %v418
      %v423 = vmul.f32 %v409, %v414
      %v424 = vmul.f32 %v407, %v418
      %v425 = vpack.c.bf16 %v423, %v421
      %v426 = vpack.c.bf16 %v424, %v422
      %427 = vrot.lane.b32.xlu0 %v331, 1
      %v428 = vpop.permute.xlu0 %427
      %429 = vrot.lane.b32.xlu0 %v333, 1
      %v430 = vpop.permute.xlu0 %429
      %431 = vrot.lane.b32.xlu0 %v332, 1
      %v432 = vpop.permute.xlu0 %431
      %433 = vrot.lane.b32.xlu0 %v334, 1
      %v434 = vpop.permute.xlu0 %433
      %vm435 = vcmp.lt.s32.totalorder %v344, 1
      %v436 = vsel %vm435, %v428, %v432
      %v437 = vsel %vm435, %v430, %v434
      %v438 = vsel %vm435, %v432, %v428
      %v439 = vsel %vm435, %v434, %v430
      %v441 = vlaneseq
      %v442 = vshrl.u32 %v441, 7
      %v443 = vsub.s32 0, %v442
      %v444 = vrot.slane %v288, %v443
      %v445 = vlaneseq
      %v446 = vshrl.u32 %v445, 7
      %v447 = vsub.s32 1, %v446
      %v448 = vrot.slane %v288, %v447
      %v451 = vmul.f32 %v438, %v444
      %v452 = vmul.f32 %v436, %v448
      %v453 = vmul.f32 %v439, %v444
      %v454 = vmul.f32 %v437, %v448
      %v455 = vpack.c.bf16 %v453, %v451
      %v456 = vpack.c.bf16 %v454, %v452
      %v457 = vpack.c.bf16 %v333, %v331
      %v458 = vpack.c.bf16 %v334, %v332
      %459 = vrot.lane.b32.xlu0 %v331, 127
      %v460 = vpop.permute.xlu0 %459
      %461 = vrot.lane.b32.xlu0 %v333, 127
      %v462 = vpop.permute.xlu0 %461
      %463 = vrot.lane.b32.xlu0 %v332, 127
      %v464 = vpop.permute.xlu0 %463
      %465 = vrot.lane.b32.xlu0 %v334, 127
      %v466 = vpop.permute.xlu0 %465
      %vm467 = vcmp.lt.s32.totalorder %v344, 127
      %v468 = vsel %vm467, %v460, %v464
      %v469 = vsel %vm467, %v462, %v466
      %v470 = vsel %vm467, %v464, %v460
      %v471 = vsel %vm467, %v466, %v462
      %v473 = vlaneseq
      %v474 = vshrl.u32 %v473, 7
      %v475 = vsub.s32 0, %v474
      %v476 = vrot.slane %v290, %v475
      %v477 = vlaneseq
      %v478 = vshrl.u32 %v477, 7
      %v479 = vsub.s32 1, %v478
      %v480 = vrot.slane %v290, %v479
      %v483 = vmul.f32 %v468, %v476
      %v484 = vmul.f32 %v470, %v480
      %v485 = vmul.f32 %v469, %v476
      %v486 = vmul.f32 %v471, %v480
      %v487 = vpack.c.bf16 %v485, %v483
      %v488 = vpack.c.bf16 %v486, %v484
      %vm489 = vcmask 392192
      %v491 = vsel %vm489, %v279, 0
      %493 = vmatprep.subr.bf16.mxu0 %v456
      %494 = vmatpush1.bf16.msra.mxu0 %v455
      %495 = vmatprep.subr.bf16.mxu0 %v458
      %496 = vmatpush1.bf16.msra.mxu0 %v457
      %497 = vmatprep.subr.bf16.mxu0 %v488
      %498 = vmatpush1.bf16.msra.mxu0 %v487
      %499 = vmatprep.subr.bf16.mxu0 0
      %500 = vmatpush1.bf16.msra.mxu0 0
      %501 = vmatprep.subr.bf16.mxu0 0
      %502 = vmatpush1.bf16.msra.mxu0 0
      %503 = vmatprep.subr.bf16.mxu0 0
      %504 = vmatpush1.bf16.msra.mxu0 0
      %505 = vmatprep.subr.bf16.mxu0 0
      %506 = vmatpush1.bf16.msra.mxu0 0
      %507 = vmatprep.subr.bf16.mxu0 0
      %508 = vmatpush1.bf16.msra.mxu0 0
      %509 = vmatprep.subr.bf16.mxu0 0
      %510 = vmatpush1.bf16.msra.mxu0 0
      %511 = vmatprep.subr.bf16.mxu0 0
      %512 = vmatpush1.bf16.msra.mxu0 0
      %513 = vmatprep.subr.bf16.mxu0 0
      %514 = vmatpush1.bf16.msra.mxu0 0
      %515 = vmatprep.subr.bf16.mxu0 0
      %516 = vmatpush1.bf16.msra.mxu0 0
      %517 = vmatprep.subr.bf16.mxu0 0
      %518 = vmatpush1.bf16.msra.mxu0 0
      %519 = vmatprep.subr.bf16.mxu0 0
      %520 = vmatpush1.bf16.msra.mxu0 0
      %521 = vmatprep.subr.bf16.mxu0 0
      %522 = vmatpush1.bf16.msra.mxu0 0
      %523 = vmatprep.subr.bf16.mxu0 0
      %524 = vmatpush1.bf16.msra.mxu0 0
      %525 = vmatprep.mubr.bf16.mxu0 0
      %526 = vmatmul.mubr.bf16.gmra.mrb[0].mxu0 %v491
      %v527 = vpop.f32.mrb[0].mxu0
      %v528 = vadd.f32 0.0, %v527
      %v529 = vpop.f32.mrb[0].mxu0
      %v530 = vadd.f32 0.0, %v529
      %v531 = vpop.f32.mrb[0].mxu0
      %v532 = vpop.f32.mrb[0].mxu0
      %533 = vdwg.mxu0
      %v535 = vsel %vm489, %v277, 0
      %537 = vmatprep.subr.bf16.mxu0 %v366
      %538 = vmatpush1.bf16.msra.mxu0 %v365
      %539 = vmatprep.subr.bf16.mxu0 %v396
      %540 = vmatpush1.bf16.msra.mxu0 %v395
      %541 = vmatprep.subr.bf16.mxu0 %v426
      %542 = vmatpush1.bf16.msra.mxu0 %v425
      %543 = vmatprep.subr.bf16.mxu0 0
      %544 = vmatpush1.bf16.msra.mxu0 0
      %545 = vmatprep.subr.bf16.mxu0 0
      %546 = vmatpush1.bf16.msra.mxu0 0
      %547 = vmatprep.subr.bf16.mxu0 0
      %548 = vmatpush1.bf16.msra.mxu0 0
      %549 = vmatprep.subr.bf16.mxu0 0
      %550 = vmatpush1.bf16.msra.mxu0 0
      %551 = vmatprep.subr.bf16.mxu0 0
      %552 = vmatpush1.bf16.msra.mxu0 0
      %553 = vmatprep.subr.bf16.mxu0 0
      %554 = vmatpush1.bf16.msra.mxu0 0
      %555 = vmatprep.subr.bf16.mxu0 0
      %556 = vmatpush1.bf16.msra.mxu0 0
      %557 = vmatprep.subr.bf16.mxu0 0
      %558 = vmatpush1.bf16.msra.mxu0 0
      %559 = vmatprep.subr.bf16.mxu0 0
      %560 = vmatpush1.bf16.msra.mxu0 0
      %561 = vmatprep.subr.bf16.mxu0 0
      %562 = vmatpush1.bf16.msra.mxu0 0
      %563 = vmatprep.subr.bf16.mxu0 0
      %564 = vmatpush1.bf16.msra.mxu0 0
      %565 = vmatprep.subr.bf16.mxu0 0
      %566 = vmatpush1.bf16.msra.mxu0 0
      %567 = vmatprep.subr.bf16.mxu0 0
      %568 = vmatpush1.bf16.msra.mxu0 0
      %569 = vmatprep.mubr.bf16.mxu0 0
      %570 = vmatmul.mubr.bf16.gmra.mrb[0].mxu0 %v535
      %v571 = vpop.f32.mrb[0].mxu0
      %v572 = vadd.f32 %v528, %v571
      %v573 = vpop.f32.mrb[0].mxu0
      %v574 = vadd.f32 %v530, %v573
      %v575 = vpop.f32.mrb[0].mxu0
      %v576 = vpop.f32.mrb[0].mxu0
      %577 = vdwg.mxu0
      %578 = vrot.lane.b32.xlu0 %v331, 113
      %v579 = vpop.permute.xlu0 %578
      %580 = vrot.lane.b32.xlu0 %v333, 113
      %v581 = vpop.permute.xlu0 %580
      %582 = vrot.lane.b32.xlu0 %v332, 113
      %v583 = vpop.permute.xlu0 %582
      %584 = vrot.lane.b32.xlu0 %v334, 113
      %v585 = vpop.permute.xlu0 %584
      %vm586 = vcmp.lt.s32.totalorder %v344, 113
      %v587 = vsel %vm586, %v579, %v583
      %v588 = vsel %vm586, %v581, %v585
      %v589 = vsel %vm586, %v583, %v579
      %v590 = vsel %vm586, %v585, %v581
      %v592 = vlaneseq
      %v593 = vshrl.u32 %v592, 7
      %v594 = vsub.s32 0, %v593
      %v595 = vrot.slane %v292, %v594
      %v596 = vlaneseq
      %v597 = vshrl.u32 %v596, 7
      %v598 = vsub.s32 1, %v597
      %v599 = vrot.slane %v292, %v598
      %v602 = vmul.f32 %v587, %v595
      %v603 = vmul.f32 %v589, %v599
      %v604 = vmul.f32 %v588, %v595
      %v605 = vmul.f32 %v590, %v599
      %v606 = vpack.c.bf16 %v604, %v602
      %v607 = vpack.c.bf16 %v605, %v603
      %608 = vrot.lane.b32.xlu0 %v331, 112
      %v609 = vpop.permute.xlu0 %608
      %610 = vrot.lane.b32.xlu0 %v333, 112
      %v611 = vpop.permute.xlu0 %610
      %612 = vrot.lane.b32.xlu0 %v332, 112
      %v613 = vpop.permute.xlu0 %612
      %614 = vrot.lane.b32.xlu0 %v334, 112
      %v615 = vpop.permute.xlu0 %614
      %vm616 = vcmp.lt.s32.totalorder %v344, 112
      %v617 = vsel %vm616, %v609, %v613
      %v618 = vsel %vm616, %v611, %v615
      %v619 = vsel %vm616, %v613, %v609
      %v620 = vsel %vm616, %v615, %v611
      %v622 = vlaneseq
      %v623 = vshrl.u32 %v622, 7
      %v624 = vsub.s32 0, %v623
      %v625 = vrot.slane %v294, %v624
      %v626 = vlaneseq
      %v627 = vshrl.u32 %v626, 7
      %v628 = vsub.s32 1, %v627
      %v629 = vrot.slane %v294, %v628
      %v632 = vmul.f32 %v617, %v625
      %v633 = vmul.f32 %v619, %v629
      %v634 = vmul.f32 %v618, %v625
      %v635 = vmul.f32 %v620, %v629
      %v636 = vpack.c.bf16 %v634, %v632
      %v637 = vpack.c.bf16 %v635, %v633
      %638 = vrot.lane.b32.xlu0 %v331, 111
      %v639 = vpop.permute.xlu0 %638
      %640 = vrot.lane.b32.xlu0 %v333, 111
      %v641 = vpop.permute.xlu0 %640
      %642 = vrot.lane.b32.xlu0 %v332, 111
      %v643 = vpop.permute.xlu0 %642
      %644 = vrot.lane.b32.xlu0 %v334, 111
      %v645 = vpop.permute.xlu0 %644
      %vm646 = vcmp.lt.s32.totalorder %v344, 111
      %v647 = vsel %vm646, %v639, %v643
      %v648 = vsel %vm646, %v641, %v645
      %v649 = vsel %vm646, %v643, %v639
      %v650 = vsel %vm646, %v645, %v641
      %v652 = vlaneseq
      %v653 = vshrl.u32 %v652, 7
      %v654 = vsub.s32 0, %v653
      %v655 = vrot.slane %v296, %v654
      %v656 = vlaneseq
      %v657 = vshrl.u32 %v656, 7
      %v658 = vsub.s32 1, %v657
      %v659 = vrot.slane %v296, %v658
      %v662 = vmul.f32 %v647, %v655
      %v663 = vmul.f32 %v649, %v659
      %v664 = vmul.f32 %v648, %v655
      %v665 = vmul.f32 %v650, %v659
      %v666 = vpack.c.bf16 %v664, %v662
      %v667 = vpack.c.bf16 %v665, %v663
      %v669 = vsel %vm489, %v281, 0
      %671 = vmatprep.subr.bf16.mxu0 %v607
      %672 = vmatpush1.bf16.msra.mxu0 %v606
      %673 = vmatprep.subr.bf16.mxu0 %v637
      %674 = vmatpush1.bf16.msra.mxu0 %v636
      %675 = vmatprep.subr.bf16.mxu0 %v667
      %676 = vmatpush1.bf16.msra.mxu0 %v666
      %677 = vmatprep.subr.bf16.mxu0 0
      %678 = vmatpush1.bf16.msra.mxu0 0
      %679 = vmatprep.subr.bf16.mxu0 0
      %680 = vmatpush1.bf16.msra.mxu0 0
      %681 = vmatprep.subr.bf16.mxu0 0
      %682 = vmatpush1.bf16.msra.mxu0 0
      %683 = vmatprep.subr.bf16.mxu0 0
      %684 = vmatpush1.bf16.msra.mxu0 0
      %685 = vmatprep.subr.bf16.mxu0 0
      %686 = vmatpush1.bf16.msra.mxu0 0
      %687 = vmatprep.subr.bf16.mxu0 0
      %688 = vmatpush1.bf16.msra.mxu0 0
      %689 = vmatprep.subr.bf16.mxu0 0
      %690 = vmatpush1.bf16.msra.mxu0 0
      %691 = vmatprep.subr.bf16.mxu0 0
      %692 = vmatpush1.bf16.msra.mxu0 0
      %693 = vmatprep.subr.bf16.mxu0 0
      %694 = vmatpush1.bf16.msra.mxu0 0
      %695 = vmatprep.subr.bf16.mxu0 0
      %696 = vmatpush1.bf16.msra.mxu0 0
      %697 = vmatprep.subr.bf16.mxu0 0
      %698 = vmatpush1.bf16.msra.mxu0 0
      %699 = vmatprep.subr.bf16.mxu0 0
      %700 = vmatpush1.bf16.msra.mxu0 0
      %701 = vmatprep.subr.bf16.mxu0 0
      %702 = vmatpush1.bf16.msra.mxu0 0
      %703 = vmatprep.mubr.bf16.mxu0 0
      %704 = vmatmul.mubr.bf16.gmra.mrb[0].mxu0 %v669
      %v705 = vpop.f32.mrb[0].mxu0
      %v706 = vadd.f32 0.0, %v705
      %v707 = vpop.f32.mrb[0].mxu0
      %v708 = vadd.f32 0.0, %v707
      %v709 = vpop.f32.mrb[0].mxu0
      %v710 = vpop.f32.mrb[0].mxu0
      %711 = vdwg.mxu0
      %v712 = vadd.f32 %v572, %v706
      %v713 = vadd.f32 %v574, %v708
      %v714 = vld [vmem:[%s261] sm:$0xff]
      %v716 = vcombine.high %v714, %v714
      %718 = vst [vmem:[%s271] sm:$0xf] %v714
      %719 = vst [vmem:[%s271 + $0x8] sm:$0xf] %v716
      %v722 = vrot.slane %v712, 4
      %v723 = vrot.slane %v713, 4
      %726 = vst [vmem:[%s271] sm:$0xf0] %v722
      %727 = vst [vmem:[%s271 + $0x8] sm:$0xf0] %v723
      %p728 = scmp.lt.s32.totalorder %s17, 1
      %s729 = scalar_select %p728, %s17, 1
      %s730 = smul.addr %s729, 2
      %s731 = smul.addr %s730, 8
      %s732 = scalar_lea.vmem %s6, %s731
      // Predicated region
      $region45: #{gen_bottleneck.3} parent=43 // pred_check
        %p733 = pneg %p171
      $region46: #{gen_bottleneck.3} parent=43 // pred_check_branch
        %735 = sbr.rel (%p733) target = $region48
      $region47: #{gen_bottleneck.3} parent=43 // pred_region
        _
      $region48: #{gen_bottleneck.3} parent=43 // pred_fallthru
        _
    $region44: #{gen_bottleneck.3} parent=5 // pred_fallthru
      _
    %p736 = scmp.le.s32.totalorder 2, %s12
    // Predicated region
    $region49: #{gen_bottleneck.3} parent=5 // pred_check
      %p737 = pneg %p736
    $region50: #{gen_bottleneck.3} parent=5 // pred_check_branch
      %739 = sbr.rel (%p737) target = $region52
    $region51: #{gen_bottleneck.3} parent=5 // pred_region
      %s740 = ssub.s32 %s12, 2
      // Predicated region
      $region53: #{gen_bottleneck.3} parent=51 // pred_check
        %p741 = pneg %p177
      $region54: #{gen_bottleneck.3} parent=51 // pred_check_branch
        %743 = sbr.rel (%p741) target = $region56
      $region55: #{gen_bottleneck.3} parent=51 // pred_region
        %p744 = scmp.lt.s32.totalorder %s18, 1
        %s745 = scalar_select %p744, %s18, 1
        %s746 = smul.addr %s745, 2
        %s747 = smul.addr %s746, 8
        %s748 = scalar_lea.vmem %s6, %s747
      $region56: #{gen_bottleneck.3} parent=51 // pred_fallthru
        _
    $region52: #{gen_bottleneck.3} parent=5 // pred_fallthru
      _
  $region6: #{gen_bottleneck.3} parent=0 // loop_footer
    %s16 = sadd.s32 1, %s12
  $region7: #{gen_bottleneck.3} parent=0 // loop_footer_branch
    %11 = sbr.rel target = $region3
  $region8: #{gen_bottleneck.3} parent=0 // loop_exit
    _

// kernel: gen_bottleneck.2
$region0: #{gen_bottleneck.2}
  #allocation0 [shape = 'u32[]', space=smem, size = 0x4, offset = 0x4, fixed_abs, tag = 'smem constant byte address 0x4 - core index']
  #allocation1 [shape = 'u32[144,128]{1,0:T(1,128)}', space=vmem, size = 0x12000, scoped, tag = 'internal scratch']
  %s0 = inlined_call_operand.vmem [shape: f32[2,4,256], index: 0, kind: input, shape index: {}]
  %s1 = inlined_call_operand.vmem [shape: f32[4,1], index: 1, kind: input, shape index: {}]
  %s2 = inlined_call_operand.vmem [shape: f32[4,1], index: 2, kind: input, shape index: {}]
  %s3 = inlined_call_operand.vmem [shape: bf16[16,4], index: 3, kind: input, shape index: {}]
  %s4 = inlined_call_operand.vmem [shape: bf16[2,16,256], index: 4, kind: output, shape index: {0}]
  %s5 = inlined_call_operand.vmem [shape: f32[2,16,2], index: 5, kind: output, shape index: {1}]
  %6 = xla_tuple %s4, %s5
  %s7 = sld [smem:[#allocation0]]
  $region57: #{gen_bottleneck.2} parent=0
    _
  %s9 = ssub.s32 1, %s7
  %s10 = scalar_select 0, %s9, %s7
  loop: start=0, step=1, limit=4
  $region2: #{gen_bottleneck.2} parent=0 // loop_pre_header
    _
  $region3: #{gen_bottleneck.2} parent=0 // loop_header
    %s12 = sphi 0, %s16
    %p13 = scmp.ge.s32.totalorder %s12, 4
    %s22 = sphi 0, %s24
    %s25 = sphi 0, %s22
    %s26 = sphi 0, %s25
    %s42 = sphi 0, %s26
    %s46 = sphi 0, %s46
    %s48 = sphi 0, %s46
    %s49 = sphi 0, %s48
    %s63 = sphi 0, %s49
    %s67 = sphi 0, %s67
    %s69 = sphi 0, %s67
    %s70 = sphi 0, %s69
    %s84 = sphi 0, %s70
    %s88 = sphi 0, %s88
    %s90 = sphi 0, %s88
    %s91 = sphi 0, %s90
    %s105 = sphi 0, %s91
    %s111 = sphi 0, %s113
    %s114 = sphi 0, %s111
    %s115 = sphi 0, %s114
    %s131 = sphi 0, %s115
    %s137 = sphi 0, %s139
    %s140 = sphi 0, %s137
    %s141 = sphi 0, %s140
    %s157 = sphi 0, %s141
  $region4: #{gen_bottleneck.2} parent=0 // loop_header_branch
    %15 = sbr.rel (%p13) target = $region8
  $region5: #{gen_bottleneck.2} parent=0 // loop_body
    %s17 = ssub.s32 %s12, 1
    %s18 = ssub.s32 %s12, 2
    %s19 = sadd.s32 %s12, 1
    %s20 = ssub.s32 %s12, %s19
    %p21 = scmp.eq.s32.totalorder %s20, 0
    %s23 = sadd.s32 %s22, 1
    %s24 = scalar_select %p21, %s22, %s23
    %p27 = pneg %p21
    %p28 = scmp.eq.s32.totalorder %s12, 1
    %p29 = por %p27, %p28
    %p30 = scmp.ne.s32.totalorder %s22, %s25
    %p31 = scmp.eq.s32.totalorder %s12, 0
    %p32 = por %p30, %p31
    %p33 = scmp.ne.s32.totalorder %s22, %s25
    %p34 = scmp.eq.s32.totalorder %s17, 1
    %p35 = por %p33, %p34
    %p36 = scmp.ne.s32.totalorder %s25, %s26
    %p37 = scmp.eq.s32.totalorder %s17, 0
    %p38 = por %p36, %p37
    %p39 = scmp.ne.s32.totalorder %s25, %s26
    %p40 = scmp.eq.s32.totalorder %s18, 1
    %p41 = por %p39, %p40
    %p43 = scmp.ne.s32.totalorder %s26, %s42
    %p44 = scmp.eq.s32.totalorder %s18, 0
    %p45 = por %p43, %p44
    %s47 = sadd.s32 %s46, 1
    %p50 = scmp.eq.s32.totalorder %s12, 1
    %p51 = scmp.ne.s32.totalorder %s46, %s48
    %p52 = scmp.eq.s32.totalorder %s12, 0
    %p53 = por %p51, %p52
    %p54 = scmp.ne.s32.totalorder %s46, %s48
    %p55 = scmp.eq.s32.totalorder %s17, 1
    %p56 = por %p54, %p55
    %p57 = scmp.ne.s32.totalorder %s48, %s49
    %p58 = scmp.eq.s32.totalorder %s17, 0
    %p59 = por %p57, %p58
    %p60 = scmp.ne.s32.totalorder %s48, %s49
    %p61 = scmp.eq.s32.totalorder %s18, 1
    %p62 = por %p60, %p61
    %p64 = scmp.ne.s32.totalorder %s49, %s63
    %p65 = scmp.eq.s32.totalorder %s18, 0
    %p66 = por %p64, %p65
    %s68 = sadd.s32 %s67, 1
    %p71 = scmp.eq.s32.totalorder %s12, 1
    %p72 = scmp.ne.s32.totalorder %s67, %s69
    %p73 = scmp.eq.s32.totalorder %s12, 0
    %p74 = por %p72, %p73
    %p75 = scmp.ne.s32.totalorder %s67, %s69
    %p76 = scmp.eq.s32.totalorder %s17, 1
    %p77 = por %p75, %p76
    %p78 = scmp.ne.s32.totalorder %s69, %s70
    %p79 = scmp.eq.s32.totalorder %s17, 0
    %p80 = por %p78, %p79
    %p81 = scmp.ne.s32.totalorder %s69, %s70
    %p82 = scmp.eq.s32.totalorder %s18, 1
    %p83 = por %p81, %p82
    %p85 = scmp.ne.s32.totalorder %s70, %s84
    %p86 = scmp.eq.s32.totalorder %s18, 0
    %p87 = por %p85, %p86
    %s89 = sadd.s32 %s88, 1
    %p92 = scmp.eq.s32.totalorder %s12, 1
    %p93 = scmp.ne.s32.totalorder %s88, %s90
    %p94 = scmp.eq.s32.totalorder %s12, 0
    %p95 = por %p93, %p94
    %p96 = scmp.ne.s32.totalorder %s88, %s90
    %p97 = scmp.eq.s32.totalorder %s17, 1
    %p98 = por %p96, %p97
    %p99 = scmp.ne.s32.totalorder %s90, %s91
    %p100 = scmp.eq.s32.totalorder %s17, 0
    %p101 = por %p99, %p100
    %p102 = scmp.ne.s32.totalorder %s90, %s91
    %p103 = scmp.eq.s32.totalorder %s18, 1
    %p104 = por %p102, %p103
    %p106 = scmp.ne.s32.totalorder %s91, %s105
    %p107 = scmp.eq.s32.totalorder %s18, 0
    %p108 = por %p106, %p107
    %s109 = ssub.s32 %s12, %s19
    %p110 = scmp.eq.s32.totalorder %s109, 0
    %s112 = sadd.s32 %s111, 1
    %s113 = scalar_select %p110, %s111, %s112
    %p116 = pneg %p110
    %p117 = scmp.eq.s32.totalorder %s12, 1
    %p118 = por %p116, %p117
    %p119 = scmp.ne.s32.totalorder %s111, %s114
    %p120 = scmp.eq.s32.totalorder %s12, 0
    %p121 = por %p119, %p120
    %p122 = scmp.ne.s32.totalorder %s111, %s114
    %p123 = scmp.eq.s32.totalorder %s17, 1
    %p124 = por %p122, %p123
    %p125 = scmp.ne.s32.totalorder %s114, %s115
    %p126 = scmp.eq.s32.totalorder %s17, 0
    %p127 = por %p125, %p126
    %p128 = scmp.ne.s32.totalorder %s114, %s115
    %p129 = scmp.eq.s32.totalorder %s18, 1
    %p130 = por %p128, %p129
    %p132 = scmp.ne.s32.totalorder %s115, %s131
    %p133 = scmp.eq.s32.totalorder %s18, 0
    %p134 = por %p132, %p133
    %s135 = ssub.s32 %s12, %s19
    %p136 = scmp.eq.s32.totalorder %s135, 0
    %s138 = sadd.s32 %s137, 1
    %s139 = scalar_select %p136, %s137, %s138
    %p142 = pneg %p136
    %p143 = scmp.eq.s32.totalorder %s12, 1
    %p144 = por %p142, %p143
    %p145 = scmp.ne.s32.totalorder %s137, %s140
    %p146 = scmp.eq.s32.totalorder %s12, 0
    %p147 = por %p145, %p146
    %p148 = scmp.ne.s32.totalorder %s137, %s140
    %p149 = scmp.eq.s32.totalorder %s17, 1
    %p150 = por %p148, %p149
    %p151 = scmp.ne.s32.totalorder %s140, %s141
    %p152 = scmp.eq.s32.totalorder %s17, 0
    %p153 = por %p151, %p152
    %p154 = scmp.ne.s32.totalorder %s140, %s141
    %p155 = scmp.eq.s32.totalorder %s18, 1
    %p156 = por %p154, %p155
    %p158 = scmp.ne.s32.totalorder %s141, %s157
    %p159 = scmp.eq.s32.totalorder %s18, 0
    %p160 = por %p158, %p159
    %p161 = scmp.le.s32.totalorder 1, %s12
    %p162 = scmp.lt.s32.totalorder %s12, 3
    %p163 = pnand %p161, %p162
    %p164 = pneg %p163
    // Predicated region
    $region9: #{gen_bottleneck.2} parent=5 // pred_check
      _
    $region10: #{gen_bottleneck.2} parent=5 // pred_check_branch
      %166 = sbr.rel (%p163) target = $region12
    $region11: #{gen_bottleneck.2} parent=5 // pred_region
      %s167 = ssub.s32 %s12, 1
      // Predicated region
      $region13: #{gen_bottleneck.2} parent=11 // pred_check
        %p168 = pneg %p59
      $region14: #{gen_bottleneck.2} parent=11 // pred_check_branch
        %170 = sbr.rel (%p168) target = $region16
      $region15: #{gen_bottleneck.2} parent=11 // pred_region
        _
      $region16: #{gen_bottleneck.2} parent=11 // pred_fallthru
        _
      // Predicated region
      $region17: #{gen_bottleneck.2} parent=11 // pred_check
        %p171 = pneg %p80
      $region18: #{gen_bottleneck.2} parent=11 // pred_check_branch
        %173 = sbr.rel (%p171) target = $region20
      $region19: #{gen_bottleneck.2} parent=11 // pred_region
        _
      $region20: #{gen_bottleneck.2} parent=11 // pred_fallthru
        _
      // Predicated region
      $region21: #{gen_bottleneck.2} parent=11 // pred_check
        %p174 = pneg %p101
      $region22: #{gen_bottleneck.2} parent=11 // pred_check_branch
        %176 = sbr.rel (%p174) target = $region24
      $region23: #{gen_bottleneck.2} parent=11 // pred_region
        _
      $region24: #{gen_bottleneck.2} parent=11 // pred_fallthru
        _
    $region12: #{gen_bottleneck.2} parent=5 // pred_fallthru
      _
    %p177 = scmp.lt.s32.totalorder %s12, 2
    // Predicated region
    $region25: #{gen_bottleneck.2} parent=5 // pred_check
      %p178 = pneg %p177
    $region26: #{gen_bottleneck.2} parent=5 // pred_check_branch
      %180 = sbr.rel (%p178) target = $region28
    $region27: #{gen_bottleneck.2} parent=5 // pred_region
      // Predicated region
      $region29: #{gen_bottleneck.2} parent=27 // pred_check
        %p181 = pneg %p32
      $region30: #{gen_bottleneck.2} parent=27 // pred_check_branch
        %183 = sbr.rel (%p181) target = $region32
      $region31: #{gen_bottleneck.2} parent=27 // pred_region
        %p184 = scmp.lt.s32.totalorder %s12, 1
        %s185 = scalar_select %p184, %s12, 1
        %s186 = smul.addr %s185, 2
        %s187 = smul.addr %s186, 4
        %s188 = scalar_lea.vmem %s0, %s187
      $region32: #{gen_bottleneck.2} parent=27 // pred_fallthru
        _
    $region28: #{gen_bottleneck.2} parent=5 // pred_fallthru
      _
    %p189 = scmp.le.s32.totalorder 1, %s12
    %p190 = scmp.lt.s32.totalorder %s12, 3
    %p191 = pnand %p189, %p190
    %p192 = pneg %p191
    // Predicated region
    $region33: #{gen_bottleneck.2} parent=5 // pred_check
      _
    $region34: #{gen_bottleneck.2} parent=5 // pred_check_branch
      %194 = sbr.rel (%p191) target = $region36
    $region35: #{gen_bottleneck.2} parent=5 // pred_region
      %s195 = ssub.s32 %s12, 1
      %p196 = scmp.lt.s32.totalorder %s17, 1
      %s197 = scalar_select %p196, %s17, 1
      %s198 = smul.addr %s197, 2
      %s199 = smul.addr %s198, 4
      %s200 = scalar_lea.vmem %s0, %s199
      %p201 = pneg %p38
      %p202 = pneg %p35
      %p203 = pneg %p59
      %p204 = pneg %p56
      %p205 = pneg %p80
      %p206 = pneg %p77
      %p207 = pneg %p101
      %p208 = pneg %p98
      %p209 = pneg %p127
      %p210 = pneg %p124
      %p211 = scmp.lt.s32.totalorder %s17, 1
      %s212 = scalar_select %p211, %s17, 1
      %s213 = smul.addr %s212, 4
      %s214 = smul.addr %s213, 4
      %s215 = scalar_lea.vmem %s4, %s214
      %p216 = pneg %p153
      %p217 = pneg %p150
      %p218 = scmp.lt.s32.totalorder %s17, 1
      %s219 = scalar_select %p218, %s17, 1
      %s220 = smul.addr %s219, 2
      %s221 = smul.addr %s220, 8
      %s222 = scalar_lea.vmem %s5, %s221
      %p223 = scmp.lt.s32.totalorder %s17, 1
      %s224 = scalar_select %p223, %s17, 1
      %s225 = smul.addr %s224, 2
      %s226 = smul.addr %s225, 4
      %s227 = scalar_lea.vmem %s0, %s226
      %p228 = scmp.lt.s32.totalorder %s17, 1
      %s229 = scalar_select %p228, %s17, 1
      %s230 = smul.addr %s229, 4
      %s231 = smul.addr %s230, 4
      %s232 = scalar_lea.vmem %s4, %s231
      %p233 = scmp.lt.s32.totalorder %s17, 1
      %s234 = scalar_select %p233, %s17, 1
      %s235 = smul.addr %s234, 2
      %s236 = smul.addr %s235, 8
      %s237 = scalar_lea.vmem %s5, %s236
      %v239 = vld [vmem:[%s1] sm:$0xf]
      %v240 = vld [vmem:[%s2] sm:$0xf]
      %v241 = vld [vmem:[%s3] sm:$0xf]
      %v242 = vld [vmem:[%s3 + $0x4] sm:$0xf]
      %v243 = vld [vmem:[%s227] sm:$0xff]
      %245 = vset.pattern.permute.xlu0 0
      %246 = vperm.xlu0 %245, %v239
      %v247 = vpop.permute.xlu0 %246
      %v249 = vunpack.c.l.s4 839922192
      %v250 = vunpack.c.0.s8 %v249
      %v251 = vlaneseq
      %v252 = vshrl.u32 %v251, 7
      %v253 = vsub.s32 %v250, %v252
      %v254 = vrot.slane %v247, %v253
      %v256 = vmul.f32 %v243, %v254
      %258 = vset.pattern.permute.xlu0 0
      %259 = vperm.xlu0 %258, %v240
      %v260 = vpop.permute.xlu0 %259
      %v262 = vunpack.c.l.s4 839922192
      %v263 = vunpack.c.0.s8 %v262
      %v264 = vlaneseq
      %v265 = vshrl.u32 %v264, 7
      %v266 = vsub.s32 %v263, %v265
      %v267 = vrot.slane %v260, %v266
      %v269 = vadd.f32 %v256, %v267
      %v270 = vmax.f32 %v269, 0.0
      %v272 = vcombine.high %v270, %v270
      %v274 = vpack.c.bf16 %v270, %v270
      %v275 = vpack.c.bf16 %v272, %v272
      %v278 = vunpack.c.l.b16 %v241
      %v279 = vunpack.c.l.b16 %v242
      %v280 = vpack.c.b16 %v279, %v278
      %vm281 = vcmask 31744
      %v283 = vsel %vm281, %v280, 0
      %vm285 = vcmask 1041408
      %v287 = vsel %vm285, %v274, 0
      %v290 = vsel %vm285, %v275, 0
      %292 = vmatprep.subr.bf16.mxu0 %v290
      %293 = vmatpush1.bf16.msra.mxu0 %v287
      %294 = vmatprep.subr.bf16.mxu0 0
      %295 = vmatpush1.bf16.msra.mxu0 0
      %296 = vmatprep.subr.bf16.mxu0 0
      %297 = vmatpush1.bf16.msra.mxu0 0
      %298 = vmatprep.subr.bf16.mxu0 0
      %299 = vmatpush1.bf16.msra.mxu0 0
      %300 = vmatprep.subr.bf16.mxu0 0
      %301 = vmatpush1.bf16.msra.mxu0 0
      %302 = vmatprep.subr.bf16.mxu0 0
      %303 = vmatpush1.bf16.msra.mxu0 0
      %304 = vmatprep.subr.bf16.mxu0 0
      %305 = vmatpush1.bf16.msra.mxu0 0
      %306 = vmatprep.subr.bf16.mxu0 0
      %307 = vmatpush1.bf16.msra.mxu0 0
      %308 = vmatprep.subr.bf16.mxu0 0
      %309 = vmatpush1.bf16.msra.mxu0 0
      %310 = vmatprep.subr.bf16.mxu0 0
      %311 = vmatpush1.bf16.msra.mxu0 0
      %312 = vmatprep.subr.bf16.mxu0 0
      %313 = vmatpush1.bf16.msra.mxu0 0
      %314 = vmatprep.subr.bf16.mxu0 0
      %315 = vmatpush1.bf16.msra.mxu0 0
      %316 = vmatprep.subr.bf16.mxu0 0
      %317 = vmatpush1.bf16.msra.mxu0 0
      %318 = vmatprep.subr.bf16.mxu0 0
      %319 = vmatpush1.bf16.msra.mxu0 0
      %320 = vmatprep.subr.bf16.mxu0 0
      %321 = vmatpush1.bf16.msra.mxu0 0
      %322 = vmatprep.subr.bf16.mxu0 0
      %323 = vmatpush1.bf16.msra.mxu0 0
      %324 = vmatprep.mubr.bf16.mxu0 0
      %325 = vmatmul.mubr.bf16.gmra.mrb[0].mxu0 %v283
      %v326 = vpop.f32.mrb[0].mxu0
      %v327 = vadd.f32 0.0, %v326
      %v328 = vpop.f32.mrb[0].mxu0
      %v329 = vadd.f32 0.0, %v328
      %v330 = vpop.f32.mrb[0].mxu0
      %v331 = vadd.f32 0.0, %v330
      %v332 = vpop.f32.mrb[0].mxu0
      %v333 = vadd.f32 0.0, %v332
      %334 = vdwg.mxu0
      %v335 = vpack.c.bf16 %v331, %v327
      %v336 = vpack.c.bf16 %v333, %v329
      %v339 = vunpack.c.l.b16 %v335
      %v340 = vunpack.c.l.b16 %v336
      %v341 = vunpack.c.h.b16 %v335
      %v342 = vunpack.c.h.b16 %v336
      %v343 = vpack.c.b16 %v340, %v339
      %v344 = vpack.c.b16 %v342, %v341
      %347 = vst [vmem:[%s232] sm:$0xff] %v343
      %348 = vst [vmem:[%s232 + $0x8] sm:$0xff] %v344
      %v349 = vadd.f32 %v327, %v329
      %350 = vadd.xlane.f32.xlu0 %v349
      %v351 = vpop.xlane.xlu0 %350
      %v352 = vadd.f32 %v331, %v333
      %353 = vadd.xlane.f32.xlu0 %v352
      %v354 = vpop.xlane.xlu0 %353
      %v355 = vmul.f32 %v327, %v327
      %v356 = vmul.f32 %v329, %v329
      %v357 = vmul.f32 %v331, %v331
      %v358 = vmul.f32 %v333, %v333
      %v359 = vadd.f32 %v355, %v356
      %360 = vadd.xlane.f32.xlu0 %v359
      %v361 = vpop.xlane.xlu0 %360
      %v362 = vadd.f32 %v357, %v358
      %363 = vadd.xlane.f32.xlu0 %v362
      %v364 = vpop.xlane.xlu0 %363
      %vm365 = vcmask 7168
      %v366 = vsel %vm365, %v351, %v361
      %v367 = vsel %vm365, %v354, %v364
      %vm368 = vcmask 15360
      %369 = vst.msk [vmem:[%s237] sm:$0xff] %vm368, %v366
      %370 = vst.msk [vmem:[%s237 + $0x8] sm:$0xff] %vm368, %v367
      %p371 = scmp.lt.s32.totalorder %s17, 1
      %s372 = scalar_select %p371, %s17, 1
      %s373 = smul.addr %s372, 4
      %s374 = smul.addr %s373, 4
      %s375 = scalar_lea.vmem %s4, %s374
      %p376 = scmp.lt.s32.totalorder %s17, 1
      %s377 = scalar_select %p376, %s17, 1
      %s378 = smul.addr %s377, 2
      %s379 = smul.addr %s378, 8
      %s380 = scalar_lea.vmem %s5, %s379
      // Predicated region
      $region37: #{gen_bottleneck.2} parent=35 // pred_check
        %p381 = pneg %p124
      $region38: #{gen_bottleneck.2} parent=35 // pred_check_branch
        %383 = sbr.rel (%p381) target = $region40
      $region39: #{gen_bottleneck.2} parent=35 // pred_region
        _
      $region40: #{gen_bottleneck.2} parent=35 // pred_fallthru
        _
      // Predicated region
      $region41: #{gen_bottleneck.2} parent=35 // pred_check
        %p384 = pneg %p150
      $region42: #{gen_bottleneck.2} parent=35 // pred_check_branch
        %386 = sbr.rel (%p384) target = $region44
      $region43: #{gen_bottleneck.2} parent=35 // pred_region
        _
      $region44: #{gen_bottleneck.2} parent=35 // pred_fallthru
        _
    $region36: #{gen_bottleneck.2} parent=5 // pred_fallthru
      _
    %p387 = scmp.le.s32.totalorder 2, %s12
    // Predicated region
    $region45: #{gen_bottleneck.2} parent=5 // pred_check
      %p388 = pneg %p387
    $region46: #{gen_bottleneck.2} parent=5 // pred_check_branch
      %390 = sbr.rel (%p388) target = $region48
    $region47: #{gen_bottleneck.2} parent=5 // pred_region
      %s391 = ssub.s32 %s12, 2
      // Predicated region
      $region49: #{gen_bottleneck.2} parent=47 // pred_check
        %p392 = pneg %p130
      $region50: #{gen_bottleneck.2} parent=47 // pred_check_branch
        %394 = sbr.rel (%p392) target = $region52
      $region51: #{gen_bottleneck.2} parent=47 // pred_region
        %p395 = scmp.lt.s32.totalorder %s18, 1
        %s396 = scalar_select %p395, %s18, 1
        %s397 = smul.addr %s396, 4
        %s398 = smul.addr %s397, 4
        %s399 = scalar_lea.vmem %s4, %s398
      $region52: #{gen_bottleneck.2} parent=47 // pred_fallthru
        _
      // Predicated region
      $region53: #{gen_bottleneck.2} parent=47 // pred_check
        %p400 = pneg %p156
      $region54: #{gen_bottleneck.2} parent=47 // pred_check_branch
        %402 = sbr.rel (%p400) target = $region56
      $region55: #{gen_bottleneck.2} parent=47 // pred_region
        %p403 = scmp.lt.s32.totalorder %s18, 1
        %s404 = scalar_select %p403, %s18, 1
        %s405 = smul.addr %s404, 2
        %s406 = smul.addr %s405, 8
        %s407 = scalar_lea.vmem %s5, %s406
      $region56: #{gen_bottleneck.2} parent=47 // pred_fallthru
        _
    $region48: #{gen_bottleneck.2} parent=5 // pred_fallthru
      _
  $region6: #{gen_bottleneck.2} parent=0 // loop_footer
    %s16 = sadd.s32 1, %s12
  $region7: #{gen_bottleneck.2} parent=0 // loop_footer_branch
    %11 = sbr.rel target = $region3
  $region8: #{gen_bottleneck.2} parent=0 // loop_exit
    _

</llo_original>
